<compile_context>
chip_gen: v7x
topology: tpu7x:2x2x1
jax: 0.10.0
libtpu: 0.0.40
codegen_flags: <defaults>
</compile_context>

<pallas_src>
import functools

import jax
import jax.numpy as jnp
from jax.experimental import pallas as pl
from jax.experimental.pallas import tpu as pltpu

# Compat shim: newer jax exposes pltpu.CompilerParams, older jax TPUCompilerParams.
_CompilerParams = getattr(pltpu, "CompilerParams", None) or getattr(
    pltpu, "TPUCompilerParams"
)


# ---------------------------------------------------------------------------
# Kernel 1: fused conv-as-matmul + bias + ReLU + 2x2 max-pool (stride 2).
#   taps: [4, Kp, TM]  - tap-major im2col (K padded to 8), lane = pooled positions
#   w:    [Cout, Kp]
#   b:    [Cout, 1]
#   o:    [Cout, TM]   - channel-major, lane-dense (TM = tile of B*Hp*Wp)
# relu(max_t(conv_t) + b) == max_t(relu(conv_t + b)) since bias is tap-invariant
# and relu/max are monotone, so this matches PyTorch's pool(relu(conv(x))).
# ---------------------------------------------------------------------------
def _conv_relu_pool_kernel(taps_ref, w_ref, b_ref, o_ref):
    w = w_ref[...]
    m = jnp.dot(w, taps_ref[0], preferred_element_type=jnp.float32)
    for t in range(1, 4):
        m = jnp.maximum(
            m, jnp.dot(w, taps_ref[t], preferred_element_type=jnp.float32)
        )
    m = m + b_ref[...]
    o_ref[...] = jnp.maximum(m, 0.0).astype(o_ref.dtype)


def conv_relu_pool(x_cm, w, b, *, tile_m=512):
    """x_cm: [Cin, B, H, W] channel-major, w: [Cout, Cin, KH, KW], b: [Cout].

    Returns pooled+ReLU'd activation in channel-major layout [Cout, B, Hp, Wp].
    """
    Cin, B, H, W = x_cm.shape
    Cout, Cin2, KH, KW = w.shape
    assert Cin == Cin2
    Ho, Wo = H - KH + 1, W - KW + 1
    Hp, Wp = Ho // 2, Wo // 2
    K = Cin * KH * KW
    Kp = ((K + 7) // 8) * 8  # pad contraction dim to a sublane multiple
    Mp = B * Hp * Wp

    # Wrapper-side im2col for the 4 pool taps: strided slices + stack + reshape
    # only (no transposes), feature order (cin, kh, kw), column order (b, ph, pw).
    taps = []
    for dh in (0, 1):
        for dw in (0, 1):
            cols = [
                x_cm[
                    :,
                    :,
                    dh + kh : dh + kh + 2 * Hp : 2,
                    dw + kw : dw + kw + 2 * Wp : 2,
                ]
                for kh in range(KH)
                for kw in range(KW)
            ]
            t = jnp.stack(cols, axis=1)  # [Cin, KH*KW, B, Hp, Wp]
            taps.append(t.reshape(K, Mp))
    taps = jnp.stack(taps, axis=0)  # [4, K, Mp]

    w_mat = w.reshape(Cout, K)
    if Kp != K:
        taps = jnp.pad(taps, ((0, 0), (0, Kp - K), (0, 0)))
        w_mat = jnp.pad(w_mat, ((0, 0), (0, Kp - K)))
    b_col = b.reshape(Cout, 1)

    # Lane(M)-tiled grid when the pooled-position axis is large & divisible;
    # otherwise a single full-width block (LeNet @ B=2 fits VMEM trivially).
    if Mp > tile_m and Mp % tile_m == 0:
        tm, grid_m = tile_m, Mp // tile_m
    else:
        tm, grid_m = Mp, 1

    out = pl.pallas_call(
        _conv_relu_pool_kernel,
        out_shape=jax.ShapeDtypeStruct((Cout, Mp), jnp.float32),
        grid=(grid_m,),
        in_specs=[
            pl.BlockSpec((4, Kp, tm), lambda i: (0, 0, i)),
            pl.BlockSpec((Cout, Kp), lambda i: (0, 0)),
            pl.BlockSpec((Cout, 1), lambda i: (0, 0)),
        ],
        out_specs=pl.BlockSpec((Cout, tm), lambda i: (0, i)),
        compiler_params=_CompilerParams(dimension_semantics=("parallel",)),
    )(taps, w_mat, b_col)

    return out.reshape(Cout, B, Hp, Wp)  # stays channel-major for the next stage


# ---------------------------------------------------------------------------
# Kernel 2: fused fc1 -> ReLU -> fc2 -> ReLU -> fc3.
# Hidden widths are zero-padded to 128 lanes; intermediates never leave VMEM.
# ---------------------------------------------------------------------------
def _fc3_fused_kernel(x_ref, w1_ref, b1_ref, w2_ref, b2_ref, w3_ref, b3_ref, o_ref):
    h = jnp.dot(x_ref[...], w1_ref[...], preferred_element_type=jnp.float32)
    h = jnp.maximum(h + b1_ref[...], 0.0)
    h = jnp.dot(h, w2_ref[...], preferred_element_type=jnp.float32)
    h = jnp.maximum(h + b2_ref[...], 0.0)
    o = jnp.dot(h, w3_ref[...], preferred_element_type=jnp.float32) + b3_ref[...]
    o_ref[...] = o.astype(o_ref.dtype)


def fc3_fused(x, w1, b1, w2, b2, w3, b3):
    B, K1 = x.shape
    H1 = 128  # fc1 width 120 -> 128
    H2 = 128  # fc2 width  84 -> 128
    N = w3.shape[1]

    # Zero-padding keeps results exact: padded columns get bias 0 -> relu 0,
    # and the corresponding padded weight rows of the next layer are 0.
    w1p = jnp.pad(w1, ((0, 0), (0, H1 - w1.shape[1])))
    b1p = jnp.pad(b1.reshape(1, -1), ((0, 0), (0, H1 - b1.shape[0])))
    w2p = jnp.pad(w2, ((0, H1 - w2.shape[0]), (0, H2 - w2.shape[1])))
    b2p = jnp.pad(b2.reshape(1, -1), ((0, 0), (0, H2 - b2.shape[0])))
    w3p = jnp.pad(w3, ((0, H2 - w3.shape[0]), (0, 0)))
    b3p = b3.reshape(1, -1)

    return pl.pallas_call(
        _fc3_fused_kernel,
        out_shape=jax.ShapeDtypeStruct((B, N), jnp.float32),
        grid=(1,),
        in_specs=[
            pl.BlockSpec((B, K1), lambda i: (0, 0)),
            pl.BlockSpec((K1, H1), lambda i: (0, 0)),
            pl.BlockSpec((1, H1), lambda i: (0, 0)),
            pl.BlockSpec((H1, H2), lambda i: (0, 0)),
            pl.BlockSpec((1, H2), lambda i: (0, 0)),
            pl.BlockSpec((H2, N), lambda i: (0, 0)),
            pl.BlockSpec((1, N), lambda i: (0, 0)),
        ],
        out_specs=pl.BlockSpec((B, N), lambda i: (0, 0)),
        compiler_params=_CompilerParams(dimension_semantics=("parallel",)),
    )(x, w1p, b1p, w2p, b2p, w3p, b3p)


# ---------------------------------------------------------------------------
# Parameter initialization (deterministic, PyTorch-default-like uniform fan-in)
# FC weights are stored as [in, out].
# ---------------------------------------------------------------------------
def _uniform(key, shape, fan_in):
    bound = 1.0 / jnp.sqrt(jnp.float32(fan_in))
    return jax.random.uniform(key, shape, jnp.float32, -bound, bound)


def init_params(key):
    ks = jax.random.split(key, 10)
    return {
        "conv1_w": _uniform(ks[0], (6, 1, 5, 5), 1 * 5 * 5),
        "conv1_b": _uniform(ks[1], (6,), 1 * 5 * 5),
        "conv2_w": _uniform(ks[2], (16, 6, 5, 5), 6 * 5 * 5),
        "conv2_b": _uniform(ks[3], (16,), 6 * 5 * 5),
        "fc1_w": _uniform(ks[4], (400, 120), 400),
        "fc1_b": _uniform(ks[5], (120,), 400),
        "fc2_w": _uniform(ks[6], (120, 84), 120),
        "fc2_b": _uniform(ks[7], (84,), 120),
        "fc3_w": _uniform(ks[8], (84, 10), 84),
        "fc3_b": _uniform(ks[9], (10,), 84),
    }


# ---------------------------------------------------------------------------
# Forward pass (matches Net.forward)
# ---------------------------------------------------------------------------
def net_forward(params, x):
    # x: [B, 1, 32, 32] NCHW (PyTorch layout), float32
    B = x.shape[0]
    x_cm = x.transpose(1, 0, 2, 3)  # -> [Cin=1, B, H, W]; Cin=1 so this is free

    a1 = conv_relu_pool(x_cm, params["conv1_w"], params["conv1_b"])  # [6,  B, 14, 14]
    a2 = conv_relu_pool(a1, params["conv2_w"], params["conv2_b"])    # [16, B,  5,  5]

    # Single layout reorder before fc1 so the flatten matches PyTorch's
    # per-sample (C, H, W) order: x.view(-1, 16*5*5).
    x_fc = a2.transpose(1, 0, 2, 3).reshape(B, 16 * 5 * 5)           # [B, 400]

    return fc3_fused(
        x_fc,
        params["fc1_w"], params["fc1_b"],
        params["fc2_w"], params["fc2_b"],
        params["fc3_w"], params["fc3_b"],
    )  # [B, 10]


if __name__ == "__main__":
    key = jax.random.PRNGKey(0)
    pkey, xkey = jax.random.split(key)
    params = init_params(pkey)

    # LeNet forward requires 32x32 input so the flattened size is 16*5*5 = 400.
    x = jax.random.normal(xkey, (2, 1, 32, 32), dtype=jnp.float32)

    out = jax.jit(net_forward)(params, x)
    out = jax.block_until_ready(out)
    assert out.shape == (2, 10), out.shape
    assert bool(jnp.all(jnp.isfinite(out))), "non-finite output"
    print("KERNEL_OK")
</pallas_src>

<mosaic_0001>
module attributes {stable_mosaic.version = 11 : i64} {
  func.func @_conv_relu_pool_kernel(%arg0: i32, %arg1: memref<4x32x392xf32, #tpu.memory_space<vmem>>, %arg2: memref<6x32xf32, #tpu.memory_space<vmem>>, %arg3: memref<6x1xf32, #tpu.memory_space<vmem>>, %arg4: memref<6x392xf32, #tpu.memory_space<vmem>>) attributes {dimension_semantics = [#tpu.dimension_semantics<parallel>], iteration_bounds = array<i64: 1>, scalar_prefetch = 0 : i64, scratch_operands = 0 : i64, tpu.core_type = #tpu.core_type<tc>, window_params = [{transform_indices = @transform_0, window_bounds = array<i64: 4, 32, 392>}, {pipeline_mode = #tpu.pipeline_mode<synchronous>, transform_indices = @transform_1, window_bounds = array<i64: 6, 32>}, {pipeline_mode = #tpu.pipeline_mode<synchronous>, transform_indices = @transform_2, window_bounds = array<i64: 6, 1>}, {transform_indices = @transform_3, window_bounds = array<i64: 6, 392>}]} {
    %c0 = arith.constant 0 : index
    %c0_0 = arith.constant 0 : index
    %0 = vector.load %arg2[%c0, %c0_0] : memref<6x32xf32, #tpu.memory_space<vmem>>, vector<6x32xf32>
    %c0_1 = arith.constant 0 : index
    %c0_2 = arith.constant 0 : index
    %c0_3 = arith.constant 0 : index
    %1 = vector.load %arg1[%c0_1, %c0_2, %c0_3] : memref<4x32x392xf32, #tpu.memory_space<vmem>>, vector<1x32x392xf32>
    %2 = vector.shape_cast %1 : vector<1x32x392xf32> to vector<32x392xf32>
    %cst = arith.constant dense<0.000000e+00> : vector<6x392xf32>
    %3 = tpu.matmul %0, %2, %cst {dimension_numbers = #tpu.dot_dimension_numbers<[1], [0], [0], [1], [0, 0, 1, 1], [], []>} : vector<6x32xf32>, vector<32x392xf32>, vector<6x392xf32> -> vector<6x392xf32>
    %c1 = arith.constant 1 : index
    %c0_4 = arith.constant 0 : index
    %c0_5 = arith.constant 0 : index
    %4 = vector.load %arg1[%c1, %c0_4, %c0_5] : memref<4x32x392xf32, #tpu.memory_space<vmem>>, vector<1x32x392xf32>
    %5 = vector.shape_cast %4 : vector<1x32x392xf32> to vector<32x392xf32>
    %cst_6 = arith.constant dense<0.000000e+00> : vector<6x392xf32>
    %6 = tpu.matmul %0, %5, %cst_6 {dimension_numbers = #tpu.dot_dimension_numbers<[1], [0], [0], [1], [0, 0, 1, 1], [], []>} : vector<6x32xf32>, vector<32x392xf32>, vector<6x392xf32> -> vector<6x392xf32>
    %7 = arith.maximumf %3, %6 : vector<6x392xf32>
    %c2 = arith.constant 2 : index
    %c0_7 = arith.constant 0 : index
    %c0_8 = arith.constant 0 : index
    %8 = vector.load %arg1[%c2, %c0_7, %c0_8] : memref<4x32x392xf32, #tpu.memory_space<vmem>>, vector<1x32x392xf32>
    %9 = vector.shape_cast %8 : vector<1x32x392xf32> to vector<32x392xf32>
    %cst_9 = arith.constant dense<0.000000e+00> : vector<6x392xf32>
    %10 = tpu.matmul %0, %9, %cst_9 {dimension_numbers = #tpu.dot_dimension_numbers<[1], [0], [0], [1], [0, 0, 1, 1], [], []>} : vector<6x32xf32>, vector<32x392xf32>, vector<6x392xf32> -> vector<6x392xf32>
    %11 = arith.maximumf %7, %10 : vector<6x392xf32>
    %c3 = arith.constant 3 : index
    %c0_10 = arith.constant 0 : index
    %c0_11 = arith.constant 0 : index
    %12 = vector.load %arg1[%c3, %c0_10, %c0_11] : memref<4x32x392xf32, #tpu.memory_space<vmem>>, vector<1x32x392xf32>
    %13 = vector.shape_cast %12 : vector<1x32x392xf32> to vector<32x392xf32>
    %cst_12 = arith.constant dense<0.000000e+00> : vector<6x392xf32>
    %14 = tpu.matmul %0, %13, %cst_12 {dimension_numbers = #tpu.dot_dimension_numbers<[1], [0], [0], [1], [0, 0, 1, 1], [], []>} : vector<6x32xf32>, vector<32x392xf32>, vector<6x392xf32> -> vector<6x392xf32>
    %15 = arith.maximumf %11, %14 : vector<6x392xf32>
    %c0_13 = arith.constant 0 : index
    %c0_14 = arith.constant 0 : index
    %16 = vector.load %arg3[%c0_13, %c0_14] : memref<6x1xf32, #tpu.memory_space<vmem>>, vector<6x1xf32>
    %17 = vector.broadcast %16 : vector<6x1xf32> to vector<6x392xf32>
    %18 = arith.addf %15, %17 : vector<6x392xf32>
    %cst_15 = arith.constant 0.000000e+00 : f32
    %19 = vector.broadcast %cst_15 : f32 to vector<6x392xf32>
    %20 = arith.maximumf %18, %19 : vector<6x392xf32>
    %c0_16 = arith.constant 0 : index
    %c0_17 = arith.constant 0 : index
    %21 = vector.load %arg4[%c0_16, %c0_17] : memref<6x392xf32, #tpu.memory_space<vmem>>, vector<6x392xf32>
    tpu.vector_store %arg4[%c0_16, %c0_17], %20 {strides = array<i32>} : memref<6x392xf32, #tpu.memory_space<vmem>>, vector<6x392xf32>,
    return
  }
  func.func @transform_0(%arg0: i32) -> (i32, i32, i32) {
    %c0_i32 = arith.constant 0 : i32
    %c0_i32_0 = arith.constant 0 : i32
    %c0_i32_1 = arith.constant 0 : i32
    return %c0_i32, %c0_i32_0, %arg0 : i32, i32, i32
  }
  func.func @transform_1(%arg0: i32) -> (i32, i32) {
    %c0_i32 = arith.constant 0 : i32
    %c0_i32_0 = arith.constant 0 : i32
    %c0_i32_1 = arith.constant 0 : i32
    return %c0_i32, %c0_i32_0 : i32, i32
  }
  func.func @transform_2(%arg0: i32) -> (i32, i32) {
    %c0_i32 = arith.constant 0 : i32
    %c0_i32_0 = arith.constant 0 : i32
    %c0_i32_1 = arith.constant 0 : i32
    return %c0_i32, %c0_i32_0 : i32, i32
  }
  func.func @transform_3(%arg0: i32) -> (i32, i32) {
    %c0_i32 = arith.constant 0 : i32
    %c0_i32_0 = arith.constant 0 : i32
    return %c0_i32, %arg0 : i32, i32
  }
}

module attributes {stable_mosaic.version = 11 : i64} {
  func.func @_conv_relu_pool_kernel(%arg0: i32, %arg1: memref<4x152x50xf32, #tpu.memory_space<vmem>>, %arg2: memref<16x152xf32, #tpu.memory_space<vmem>>, %arg3: memref<16x1xf32, #tpu.memory_space<vmem>>, %arg4: memref<16x50xf32, #tpu.memory_space<vmem>>) attributes {dimension_semantics = [#tpu.dimension_semantics<parallel>], iteration_bounds = array<i64: 1>, scalar_prefetch = 0 : i64, scratch_operands = 0 : i64, tpu.core_type = #tpu.core_type<tc>, window_params = [{transform_indices = @transform_0, window_bounds = array<i64: 4, 152, 50>}, {pipeline_mode = #tpu.pipeline_mode<synchronous>, transform_indices = @transform_1, window_bounds = array<i64: 16, 152>}, {pipeline_mode = #tpu.pipeline_mode<synchronous>, transform_indices = @transform_2, window_bounds = array<i64: 16, 1>}, {transform_indices = @transform_3, window_bounds = array<i64: 16, 50>}]} {
    %c0 = arith.constant 0 : index
    %c0_0 = arith.constant 0 : index
    %0 = vector.load %arg2[%c0, %c0_0] : memref<16x152xf32, #tpu.memory_space<vmem>>, vector<16x152xf32>
    %c0_1 = arith.constant 0 : index
    %c0_2 = arith.constant 0 : index
    %c0_3 = arith.constant 0 : index
    %1 = vector.load %arg1[%c0_1, %c0_2, %c0_3] : memref<4x152x50xf32, #tpu.memory_space<vmem>>, vector<1x152x50xf32>
    %2 = vector.shape_cast %1 : vector<1x152x50xf32> to vector<152x50xf32>
    %cst = arith.constant dense<0.000000e+00> : vector<16x50xf32>
    %3 = tpu.matmul %0, %2, %cst {dimension_numbers = #tpu.dot_dimension_numbers<[1], [0], [0], [1], [0, 0, 1, 1], [], []>} : vector<16x152xf32>, vector<152x50xf32>, vector<16x50xf32> -> vector<16x50xf32>
    %c1 = arith.constant 1 : index
    %c0_4 = arith.constant 0 : index
    %c0_5 = arith.constant 0 : index
    %4 = vector.load %arg1[%c1, %c0_4, %c0_5] : memref<4x152x50xf32, #tpu.memory_space<vmem>>, vector<1x152x50xf32>
    %5 = vector.shape_cast %4 : vector<1x152x50xf32> to vector<152x50xf32>
    %cst_6 = arith.constant dense<0.000000e+00> : vector<16x50xf32>
    %6 = tpu.matmul %0, %5, %cst_6 {dimension_numbers = #tpu.dot_dimension_numbers<[1], [0], [0], [1], [0, 0, 1, 1], [], []>} : vector<16x152xf32>, vector<152x50xf32>, vector<16x50xf32> -> vector<16x50xf32>
    %7 = arith.maximumf %3, %6 : vector<16x50xf32>
    %c2 = arith.constant 2 : index
    %c0_7 = arith.constant 0 : index
    %c0_8 = arith.constant 0 : index
    %8 = vector.load %arg1[%c2, %c0_7, %c0_8] : memref<4x152x50xf32, #tpu.memory_space<vmem>>, vector<1x152x50xf32>
    %9 = vector.shape_cast %8 : vector<1x152x50xf32> to vector<152x50xf32>
    %cst_9 = arith.constant dense<0.000000e+00> : vector<16x50xf32>
    %10 = tpu.matmul %0, %9, %cst_9 {dimension_numbers = #tpu.dot_dimension_numbers<[1], [0], [0], [1], [0, 0, 1, 1], [], []>} : vector<16x152xf32>, vector<152x50xf32>, vector<16x50xf32> -> vector<16x50xf32>
    %11 = arith.maximumf %7, %10 : vector<16x50xf32>
    %c3 = arith.constant 3 : index
    %c0_10 = arith.constant 0 : index
    %c0_11 = arith.constant 0 : index
    %12 = vector.load %arg1[%c3, %c0_10, %c0_11] : memref<4x152x50xf32, #tpu.memory_space<vmem>>, vector<1x152x50xf32>
    %13 = vector.shape_cast %12 : vector<1x152x50xf32> to vector<152x50xf32>
    %cst_12 = arith.constant dense<0.000000e+00> : vector<16x50xf32>
    %14 = tpu.matmul %0, %13, %cst_12 {dimension_numbers = #tpu.dot_dimension_numbers<[1], [0], [0], [1], [0, 0, 1, 1], [], []>} : vector<16x152xf32>, vector<152x50xf32>, vector<16x50xf32> -> vector<16x50xf32>
    %15 = arith.maximumf %11, %14 : vector<16x50xf32>
    %c0_13 = arith.constant 0 : index
    %c0_14 = arith.constant 0 : index
    %16 = vector.load %arg3[%c0_13, %c0_14] : memref<16x1xf32, #tpu.memory_space<vmem>>, vector<16x1xf32>
    %17 = vector.broadcast %16 : vector<16x1xf32> to vector<16x50xf32>
    %18 = arith.addf %15, %17 : vector<16x50xf32>
    %cst_15 = arith.constant 0.000000e+00 : f32
    %19 = vector.broadcast %cst_15 : f32 to vector<16x50xf32>
    %20 = arith.maximumf %18, %19 : vector<16x50xf32>
    %c0_16 = arith.constant 0 : index
    %c0_17 = arith.constant 0 : index
    %21 = vector.load %arg4[%c0_16, %c0_17] : memref<16x50xf32, #tpu.memory_space<vmem>>, vector<16x50xf32>
    tpu.vector_store %arg4[%c0_16, %c0_17], %20 {strides = array<i32>} : memref<16x50xf32, #tpu.memory_space<vmem>>, vector<16x50xf32>,
    return
  }
  func.func @transform_0(%arg0: i32) -> (i32, i32, i32) {
    %c0_i32 = arith.constant 0 : i32
    %c0_i32_0 = arith.constant 0 : i32
    %c0_i32_1 = arith.constant 0 : i32
    return %c0_i32, %c0_i32_0, %arg0 : i32, i32, i32
  }
  func.func @transform_1(%arg0: i32) -> (i32, i32) {
    %c0_i32 = arith.constant 0 : i32
    %c0_i32_0 = arith.constant 0 : i32
    %c0_i32_1 = arith.constant 0 : i32
    return %c0_i32, %c0_i32_0 : i32, i32
  }
  func.func @transform_2(%arg0: i32) -> (i32, i32) {
    %c0_i32 = arith.constant 0 : i32
    %c0_i32_0 = arith.constant 0 : i32
    %c0_i32_1 = arith.constant 0 : i32
    return %c0_i32, %c0_i32_0 : i32, i32
  }
  func.func @transform_3(%arg0: i32) -> (i32, i32) {
    %c0_i32 = arith.constant 0 : i32
    %c0_i32_0 = arith.constant 0 : i32
    return %c0_i32, %arg0 : i32, i32
  }
}

module attributes {stable_mosaic.version = 11 : i64} {
  func.func @_fc3_fused_kernel(%arg0: i32, %arg1: memref<2x400xf32, #tpu.memory_space<vmem>>, %arg2: memref<400x128xf32, #tpu.memory_space<vmem>>, %arg3: memref<1x128xf32, #tpu.memory_space<vmem>>, %arg4: memref<128x128xf32, #tpu.memory_space<vmem>>, %arg5: memref<1x128xf32, #tpu.memory_space<vmem>>, %arg6: memref<128x10xf32, #tpu.memory_space<vmem>>, %arg7: memref<1x10xf32, #tpu.memory_space<vmem>>, %arg8: memref<2x10xf32, #tpu.memory_space<vmem>>) attributes {dimension_semantics = [#tpu.dimension_semantics<parallel>], iteration_bounds = array<i64: 1>, scalar_prefetch = 0 : i64, scratch_operands = 0 : i64, tpu.core_type = #tpu.core_type<tc>, window_params = [{pipeline_mode = #tpu.pipeline_mode<synchronous>, transform_indices = @transform_0, window_bounds = array<i64: 2, 400>}, {pipeline_mode = #tpu.pipeline_mode<synchronous>, transform_indices = @transform_1, window_bounds = array<i64: 400, 128>}, {pipeline_mode = #tpu.pipeline_mode<synchronous>, transform_indices = @transform_2, window_bounds = array<i64: 1, 128>}, {pipeline_mode = #tpu.pipeline_mode<synchronous>, transform_indices = @transform_3, window_bounds = array<i64: 128, 128>}, {pipeline_mode = #tpu.pipeline_mode<synchronous>, transform_indices = @transform_4, window_bounds = array<i64: 1, 128>}, {pipeline_mode = #tpu.pipeline_mode<synchronous>, transform_indices = @transform_5, window_bounds = array<i64: 128, 10>}, {pipeline_mode = #tpu.pipeline_mode<synchronous>, transform_indices = @transform_6, window_bounds = array<i64: 1, 10>}, {pipeline_mode = #tpu.pipeline_mode<synchronous>, transform_indices = @transform_7, window_bounds = array<i64: 2, 10>}]} {
    %c0 = arith.constant 0 : index
    %c0_0 = arith.constant 0 : index
    %0 = vector.load %arg1[%c0, %c0_0] : memref<2x400xf32, #tpu.memory_space<vmem>>, vector<2x400xf32>
    %c0_1 = arith.constant 0 : index
    %c0_2 = arith.constant 0 : index
    %1 = vector.load %arg2[%c0_1, %c0_2] : memref<400x128xf32, #tpu.memory_space<vmem>>, vector<400x128xf32>
    %cst = arith.constant dense<0.000000e+00> : vector<2x128xf32>
    %2 = tpu.matmul %0, %1, %cst {dimension_numbers = #tpu.dot_dimension_numbers<[1], [0], [0], [1], [0, 0, 1, 1], [], []>} : vector<2x400xf32>, vector<400x128xf32>, vector<2x128xf32> -> vector<2x128xf32>
    %c0_3 = arith.constant 0 : index
    %c0_4 = arith.constant 0 : index
    %3 = vector.load %arg3[%c0_3, %c0_4] : memref<1x128xf32, #tpu.memory_space<vmem>>, vector<1x128xf32>
    %4 = vector.broadcast %3 : vector<1x128xf32> to vector<2x128xf32>
    %5 = arith.addf %2, %4 : vector<2x128xf32>
    %cst_5 = arith.constant 0.000000e+00 : f32
    %6 = vector.broadcast %cst_5 : f32 to vector<2x128xf32>
    %7 = arith.maximumf %5, %6 : vector<2x128xf32>
    %c0_6 = arith.constant 0 : index
    %c0_7 = arith.constant 0 : index
    %8 = vector.load %arg4[%c0_6, %c0_7] : memref<128x128xf32, #tpu.memory_space<vmem>>, vector<128x128xf32>
    %cst_8 = arith.constant dense<0.000000e+00> : vector<2x128xf32>
    %9 = tpu.matmul %7, %8, %cst_8 {dimension_numbers = #tpu.dot_dimension_numbers<[1], [0], [0], [1], [0, 0, 1, 1], [], []>} : vector<2x128xf32>, vector<128x128xf32>, vector<2x128xf32> -> vector<2x128xf32>
    %c0_9 = arith.constant 0 : index
    %c0_10 = arith.constant 0 : index
    %10 = vector.load %arg5[%c0_9, %c0_10] : memref<1x128xf32, #tpu.memory_space<vmem>>, vector<1x128xf32>
    %11 = vector.broadcast %10 : vector<1x128xf32> to vector<2x128xf32>
    %12 = arith.addf %9, %11 : vector<2x128xf32>
    %cst_11 = arith.constant 0.000000e+00 : f32
    %13 = vector.broadcast %cst_11 : f32 to vector<2x128xf32>
    %14 = arith.maximumf %12, %13 : vector<2x128xf32>
    %c0_12 = arith.constant 0 : index
    %c0_13 = arith.constant 0 : index
    %15 = vector.load %arg6[%c0_12, %c0_13] : memref<128x10xf32, #tpu.memory_space<vmem>>, vector<128x10xf32>
    %cst_14 = arith.constant dense<0.000000e+00> : vector<2x10xf32>
    %16 = tpu.matmul %14, %15, %cst_14 {dimension_numbers = #tpu.dot_dimension_numbers<[1], [0], [0], [1], [0, 0, 1, 1], [], []>} : vector<2x128xf32>, vector<128x10xf32>, vector<2x10xf32> -> vector<2x10xf32>
    %c0_15 = arith.constant 0 : index
    %c0_16 = arith.constant 0 : index
    %17 = vector.load %arg7[%c0_15, %c0_16] : memref<1x10xf32, #tpu.memory_space<vmem>>, vector<1x10xf32>
    %18 = vector.broadcast %17 : vector<1x10xf32> to vector<2x10xf32>
    %19 = arith.addf %16, %18 : vector<2x10xf32>
    %c0_17 = arith.constant 0 : index
    %c0_18 = arith.constant 0 : index
    %20 = vector.load %arg8[%c0_17, %c0_18] : memref<2x10xf32, #tpu.memory_space<vmem>>, vector<2x10xf32>
    tpu.vector_store %arg8[%c0_17, %c0_18], %19 {strides = array<i32>} : memref<2x10xf32, #tpu.memory_space<vmem>>, vector<2x10xf32>,
    return
  }
  func.func @transform_0(%arg0: i32) -> (i32, i32) {
    %c0_i32 = arith.constant 0 : i32
    %c0_i32_0 = arith.constant 0 : i32
    %c0_i32_1 = arith.constant 0 : i32
    return %c0_i32, %c0_i32_0 : i32, i32
  }
  func.func @transform_1(%arg0: i32) -> (i32, i32) {
    %c0_i32 = arith.constant 0 : i32
    %c0_i32_0 = arith.constant 0 : i32
    %c0_i32_1 = arith.constant 0 : i32
    return %c0_i32, %c0_i32_0 : i32, i32
  }
  func.func @transform_2(%arg0: i32) -> (i32, i32) {
    %c0_i32 = arith.constant 0 : i32
    %c0_i32_0 = arith.constant 0 : i32
    %c0_i32_1 = arith.constant 0 : i32
    return %c0_i32, %c0_i32_0 : i32, i32
  }
  func.func @transform_3(%arg0: i32) -> (i32, i32) {
    %c0_i32 = arith.constant 0 : i32
    %c0_i32_0 = arith.constant 0 : i32
    %c0_i32_1 = arith.constant 0 : i32
    return %c0_i32, %c0_i32_0 : i32, i32
  }
  func.func @transform_4(%arg0: i32) -> (i32, i32) {
    %c0_i32 = arith.constant 0 : i32
    %c0_i32_0 = arith.constant 0 : i32
    %c0_i32_1 = arith.constant 0 : i32
    return %c0_i32, %c0_i32_0 : i32, i32
  }
  func.func @transform_5(%arg0: i32) -> (i32, i32) {
    %c0_i32 = arith.constant 0 : i32
    %c0_i32_0 = arith.constant 0 : i32
    %c0_i32_1 = arith.constant 0 : i32
    return %c0_i32, %c0_i32_0 : i32, i32
  }
  func.func @transform_6(%arg0: i32) -> (i32, i32) {
    %c0_i32 = arith.constant 0 : i32
    %c0_i32_0 = arith.constant 0 : i32
    %c0_i32_1 = arith.constant 0 : i32
    return %c0_i32, %c0_i32_0 : i32, i32
  }
  func.func @transform_7(%arg0: i32) -> (i32, i32) {
    %c0_i32 = arith.constant 0 : i32
    %c0_i32_0 = arith.constant 0 : i32
    %c0_i32_1 = arith.constant 0 : i32
    return %c0_i32, %c0_i32_0 : i32, i32
  }
}

</mosaic_0001>

<llo_original>
// kernel: net_forward.3
$region0: #{net_forward.3}
  #allocation0 [shape = 'u32[]', space=smem, size = 0x4, offset = 0x4, fixed_abs, tag = 'smem constant byte address 0x4 - core index']
  #allocation1 [shape = 'u32[144,128]{1,0:T(1,128)}', space=vmem, size = 0x12000, scoped, tag = 'internal scratch']
  %s0 = inlined_call_operand.vmem [shape: f32[4,32,392], index: 0, kind: input, shape index: {}]
  %s1 = inlined_call_operand.vmem [shape: f32[6,32], index: 1, kind: input, shape index: {}]
  %s2 = inlined_call_operand.vmem [shape: f32[6,1], index: 2, kind: input, shape index: {}]
  %s3 = inlined_call_operand.vmem [shape: f32[6,392], index: 3, kind: output, shape index: {}]
  %s4 = sld [smem:[#allocation0]]
  $region22: #{net_forward.3} parent=0
    _
  %s6 = ssub.s32 1, %s4
  %s7 = scalar_select 0, %s6, %s4
  // Predicated region
  $region2: #{net_forward.3} parent=0 // pred_check
    _
  $region3: #{net_forward.3} parent=0 // pred_check_branch
    %9 = sbr.rel (0) target = $region5
  $region4: #{net_forward.3} parent=0 // pred_region
    _
  $region5: #{net_forward.3} parent=0 // pred_fallthru
    _
  // Predicated region
  $region6: #{net_forward.3} parent=0 // pred_check
    _
  $region7: #{net_forward.3} parent=0 // pred_check_branch
    %11 = sbr.rel (0) target = $region9
  $region8: #{net_forward.3} parent=0 // pred_region
    _
  $region9: #{net_forward.3} parent=0 // pred_fallthru
    _
  // Predicated region
  $region10: #{net_forward.3} parent=0 // pred_check
    _
  $region11: #{net_forward.3} parent=0 // pred_check_branch
    %13 = sbr.rel (0) target = $region13
  $region12: #{net_forward.3} parent=0 // pred_region
    _
  $region13: #{net_forward.3} parent=0 // pred_fallthru
    _
  %v14 = vld [vmem:[%s1] sm:$0x3f]
  %v15 = vld [vmem:[%s0] sm:$0xff]
  %v16 = vld [vmem:[%s0 + $0x8] sm:$0xff]
  %v17 = vld [vmem:[%s0 + $0x10] sm:$0xff]
  %v18 = vld [vmem:[%s0 + $0x18] sm:$0xff]
  %v19 = vld [vmem:[%s0 + $0x20] sm:$0xff]
  %v20 = vld [vmem:[%s0 + $0x28] sm:$0xff]
  %v21 = vld [vmem:[%s0 + $0x30] sm:$0xff]
  %v22 = vld [vmem:[%s0 + $0x38] sm:$0xff]
  %v23 = vld [vmem:[%s0 + $0x40] sm:$0xff]
  %v24 = vld [vmem:[%s0 + $0x48] sm:$0xff]
  %v25 = vld [vmem:[%s0 + $0x50] sm:$0xff]
  %v26 = vld [vmem:[%s0 + $0x58] sm:$0xff]
  %v27 = vld [vmem:[%s0 + $0x60] sm:$0xff]
  %v28 = vld [vmem:[%s0 + $0x68] sm:$0xff]
  %v29 = vld [vmem:[%s0 + $0x70] sm:$0xff]
  %v30 = vld [vmem:[%s0 + $0x78] sm:$0xff]
  %vm31 = vcmask 261120
  %v33 = vsel %vm31, %v14, 0
  %35 = vmatprep.subr.mxu0 %v16
  %36 = vmatpush1.msra.mxu0 %v15
  %37 = vmatprep.subr.mxu0 %v20
  %38 = vmatpush1.msra.mxu0 %v19
  %39 = vmatprep.subr.mxu0 %v24
  %40 = vmatpush1.msra.mxu0 %v23
  %41 = vmatprep.subr.mxu0 %v28
  %42 = vmatpush1.msra.mxu0 %v27
  %43 = vmatprep.subr.mxu0 0.0
  %44 = vmatpush1.msra.mxu0 0.0
  %45 = vmatprep.subr.mxu0 0.0
  %46 = vmatpush1.msra.mxu0 0.0
  %47 = vmatprep.subr.mxu0 0.0
  %48 = vmatpush1.msra.mxu0 0.0
  %49 = vmatprep.subr.mxu0 0.0
  %50 = vmatpush1.msra.mxu0 0.0
  %51 = vmatprep.subr.mxu0 0.0
  %52 = vmatpush1.msra.mxu0 0.0
  %53 = vmatprep.subr.mxu0 0.0
  %54 = vmatpush1.msra.mxu0 0.0
  %55 = vmatprep.subr.mxu0 0.0
  %56 = vmatpush1.msra.mxu0 0.0
  %57 = vmatprep.subr.mxu0 0.0
  %58 = vmatpush1.msra.mxu0 0.0
  %59 = vmatprep.subr.mxu0 0.0
  %60 = vmatpush1.msra.mxu0 0.0
  %61 = vmatprep.subr.mxu0 0.0
  %62 = vmatpush1.msra.mxu0 0.0
  %63 = vmatprep.subr.mxu0 0.0
  %64 = vmatpush1.msra.mxu0 0.0
  %65 = vmatprep.subr.mxu0 0.0
  %66 = vmatpush1.msra.mxu0 0.0
  %67 = vmatprep.subr.mxu0 0.0
  %68 = vmatpush1.msra.mxu0 0.0
  %69 = vmatprep.subr.mxu0 0.0
  %70 = vmatpush1.msra.mxu0 0.0
  %71 = vmatprep.subr.mxu0 0.0
  %72 = vmatpush1.msra.mxu0 0.0
  %73 = vmatprep.subr.mxu0 0.0
  %74 = vmatpush1.msra.mxu0 0.0
  %75 = vmatprep.subr.mxu0 0.0
  %76 = vmatpush1.msra.mxu0 0.0
  %77 = vmatprep.subr.mxu0 0.0
  %78 = vmatpush1.msra.mxu0 0.0
  %79 = vmatprep.subr.mxu0 0.0
  %80 = vmatpush1.msra.mxu0 0.0
  %81 = vmatprep.subr.mxu0 0.0
  %82 = vmatpush1.msra.mxu0 0.0
  %83 = vmatprep.subr.mxu0 0.0
  %84 = vmatpush1.msra.mxu0 0.0
  %85 = vmatprep.subr.mxu0 0.0
  %86 = vmatpush1.msra.mxu0 0.0
  %87 = vmatprep.subr.mxu0 0.0
  %88 = vmatpush1.msra.mxu0 0.0
  %89 = vmatprep.subr.mxu0 0.0
  %90 = vmatpush1.msra.mxu0 0.0
  %91 = vmatprep.subr.mxu0 0.0
  %92 = vmatpush1.msra.mxu0 0.0
  %93 = vmatprep.subr.mxu0 0.0
  %94 = vmatpush1.msra.mxu0 0.0
  %95 = vmatprep.subr.mxu0 0.0
  %96 = vmatpush1.msra.mxu0 0.0
  %97 = vmatprep.subr.mxu0 0.0
  %98 = vmatpush1.msra.mxu0 0.0
  %99 = vmatprep.mubr.f32.mxu0 0.0
  %100 = vmatmul.mubr.f32.gmra.mrb[0].mxu0 %v33
  %v101 = vpop.f32.mrb[0].mxu0
  %v102 = vadd.f32 0.0, %v101
  %v103 = vpop.f32.mrb[0].mxu0
  %v104 = vadd.f32 0.0, %v103
  %105 = vdwg.mxu0
  %106 = vmatprep.subr.mxu0 %v18
  %107 = vmatpush1.msra.mxu0 %v17
  %108 = vmatprep.subr.mxu0 %v22
  %109 = vmatpush1.msra.mxu0 %v21
  %110 = vmatprep.subr.mxu0 %v26
  %111 = vmatpush1.msra.mxu0 %v25
  %112 = vmatprep.subr.mxu0 %v30
  %113 = vmatpush1.msra.mxu0 %v29
  %114 = vmatprep.subr.mxu0 0.0
  %115 = vmatpush1.msra.mxu0 0.0
  %116 = vmatprep.subr.mxu0 0.0
  %117 = vmatpush1.msra.mxu0 0.0
  %118 = vmatprep.subr.mxu0 0.0
  %119 = vmatpush1.msra.mxu0 0.0
  %120 = vmatprep.subr.mxu0 0.0
  %121 = vmatpush1.msra.mxu0 0.0
  %122 = vmatprep.subr.mxu0 0.0
  %123 = vmatpush1.msra.mxu0 0.0
  %124 = vmatprep.subr.mxu0 0.0
  %125 = vmatpush1.msra.mxu0 0.0
  %126 = vmatprep.subr.mxu0 0.0
  %127 = vmatpush1.msra.mxu0 0.0
  %128 = vmatprep.subr.mxu0 0.0
  %129 = vmatpush1.msra.mxu0 0.0
  %130 = vmatprep.subr.mxu0 0.0
  %131 = vmatpush1.msra.mxu0 0.0
  %132 = vmatprep.subr.mxu0 0.0
  %133 = vmatpush1.msra.mxu0 0.0
  %134 = vmatprep.subr.mxu0 0.0
  %135 = vmatpush1.msra.mxu0 0.0
  %136 = vmatprep.subr.mxu0 0.0
  %137 = vmatpush1.msra.mxu0 0.0
  %138 = vmatprep.subr.mxu0 0.0
  %139 = vmatpush1.msra.mxu0 0.0
  %140 = vmatprep.subr.mxu0 0.0
  %141 = vmatpush1.msra.mxu0 0.0
  %142 = vmatprep.subr.mxu0 0.0
  %143 = vmatpush1.msra.mxu0 0.0
  %144 = vmatprep.subr.mxu0 0.0
  %145 = vmatpush1.msra.mxu0 0.0
  %146 = vmatprep.subr.mxu0 0.0
  %147 = vmatpush1.msra.mxu0 0.0
  %148 = vmatprep.subr.mxu0 0.0
  %149 = vmatpush1.msra.mxu0 0.0
  %150 = vmatprep.subr.mxu0 0.0
  %151 = vmatpush1.msra.mxu0 0.0
  %152 = vmatprep.subr.mxu0 0.0
  %153 = vmatpush1.msra.mxu0 0.0
  %154 = vmatprep.subr.mxu0 0.0
  %155 = vmatpush1.msra.mxu0 0.0
  %156 = vmatprep.subr.mxu0 0.0
  %157 = vmatpush1.msra.mxu0 0.0
  %158 = vmatprep.subr.mxu0 0.0
  %159 = vmatpush1.msra.mxu0 0.0
  %160 = vmatprep.subr.mxu0 0.0
  %161 = vmatpush1.msra.mxu0 0.0
  %162 = vmatprep.subr.mxu0 0.0
  %163 = vmatpush1.msra.mxu0 0.0
  %164 = vmatprep.subr.mxu0 0.0
  %165 = vmatpush1.msra.mxu0 0.0
  %166 = vmatprep.subr.mxu0 0.0
  %167 = vmatpush1.msra.mxu0 0.0
  %168 = vmatprep.subr.mxu0 0.0
  %169 = vmatpush1.msra.mxu0 0.0
  %170 = vmatprep.mubr.f32.mxu0 0.0
  %171 = vmatmul.mubr.f32.gmra.mrb[0].mxu0 %v33
  %v172 = vpop.f32.mrb[0].mxu0
  %v173 = vadd.f32 0.0, %v172
  %v174 = vpop.f32.mrb[0].mxu0
  %v175 = vadd.f32 0.0, %v174
  %176 = vdwg.mxu0
  %s177 = scalar_lea.vmem %s0, 128
  %v178 = vld [vmem:[%s177] sm:$0xff]
  %v179 = vld [vmem:[%s177 + $0x8] sm:$0xff]
  %v180 = vld [vmem:[%s177 + $0x10] sm:$0xff]
  %v181 = vld [vmem:[%s177 + $0x18] sm:$0xff]
  %v182 = vld [vmem:[%s177 + $0x20] sm:$0xff]
  %v183 = vld [vmem:[%s177 + $0x28] sm:$0xff]
  %v184 = vld [vmem:[%s177 + $0x30] sm:$0xff]
  %v185 = vld [vmem:[%s177 + $0x38] sm:$0xff]
  %v186 = vld [vmem:[%s177 + $0x40] sm:$0xff]
  %v187 = vld [vmem:[%s177 + $0x48] sm:$0xff]
  %v188 = vld [vmem:[%s177 + $0x50] sm:$0xff]
  %v189 = vld [vmem:[%s177 + $0x58] sm:$0xff]
  %v190 = vld [vmem:[%s177 + $0x60] sm:$0xff]
  %v191 = vld [vmem:[%s177 + $0x68] sm:$0xff]
  %v192 = vld [vmem:[%s177 + $0x70] sm:$0xff]
  %v193 = vld [vmem:[%s177 + $0x78] sm:$0xff]
  %194 = vmatprep.subr.mxu0 %v179
  %195 = vmatpush1.msra.mxu0 %v178
  %196 = vmatprep.subr.mxu0 %v183
  %197 = vmatpush1.msra.mxu0 %v182
  %198 = vmatprep.subr.mxu0 %v187
  %199 = vmatpush1.msra.mxu0 %v186
  %200 = vmatprep.subr.mxu0 %v191
  %201 = vmatpush1.msra.mxu0 %v190
  %202 = vmatprep.subr.mxu0 0.0
  %203 = vmatpush1.msra.mxu0 0.0
  %204 = vmatprep.subr.mxu0 0.0
  %205 = vmatpush1.msra.mxu0 0.0
  %206 = vmatprep.subr.mxu0 0.0
  %207 = vmatpush1.msra.mxu0 0.0
  %208 = vmatprep.subr.mxu0 0.0
  %209 = vmatpush1.msra.mxu0 0.0
  %210 = vmatprep.subr.mxu0 0.0
  %211 = vmatpush1.msra.mxu0 0.0
  %212 = vmatprep.subr.mxu0 0.0
  %213 = vmatpush1.msra.mxu0 0.0
  %214 = vmatprep.subr.mxu0 0.0
  %215 = vmatpush1.msra.mxu0 0.0
  %216 = vmatprep.subr.mxu0 0.0
  %217 = vmatpush1.msra.mxu0 0.0
  %218 = vmatprep.subr.mxu0 0.0
  %219 = vmatpush1.msra.mxu0 0.0
  %220 = vmatprep.subr.mxu0 0.0
  %221 = vmatpush1.msra.mxu0 0.0
  %222 = vmatprep.subr.mxu0 0.0
  %223 = vmatpush1.msra.mxu0 0.0
  %224 = vmatprep.subr.mxu0 0.0
  %225 = vmatpush1.msra.mxu0 0.0
  %226 = vmatprep.subr.mxu0 0.0
  %227 = vmatpush1.msra.mxu0 0.0
  %228 = vmatprep.subr.mxu0 0.0
  %229 = vmatpush1.msra.mxu0 0.0
  %230 = vmatprep.subr.mxu0 0.0
  %231 = vmatpush1.msra.mxu0 0.0
  %232 = vmatprep.subr.mxu0 0.0
  %233 = vmatpush1.msra.mxu0 0.0
  %234 = vmatprep.subr.mxu0 0.0
  %235 = vmatpush1.msra.mxu0 0.0
  %236 = vmatprep.subr.mxu0 0.0
  %237 = vmatpush1.msra.mxu0 0.0
  %238 = vmatprep.subr.mxu0 0.0
  %239 = vmatpush1.msra.mxu0 0.0
  %240 = vmatprep.subr.mxu0 0.0
  %241 = vmatpush1.msra.mxu0 0.0
  %242 = vmatprep.subr.mxu0 0.0
  %243 = vmatpush1.msra.mxu0 0.0
  %244 = vmatprep.subr.mxu0 0.0
  %245 = vmatpush1.msra.mxu0 0.0
  %246 = vmatprep.subr.mxu0 0.0
  %247 = vmatpush1.msra.mxu0 0.0
  %248 = vmatprep.subr.mxu0 0.0
  %249 = vmatpush1.msra.mxu0 0.0
  %250 = vmatprep.subr.mxu0 0.0
  %251 = vmatpush1.msra.mxu0 0.0
  %252 = vmatprep.subr.mxu0 0.0
  %253 = vmatpush1.msra.mxu0 0.0
  %254 = vmatprep.subr.mxu0 0.0
  %255 = vmatpush1.msra.mxu0 0.0
  %256 = vmatprep.subr.mxu0 0.0
  %257 = vmatpush1.msra.mxu0 0.0
  %258 = vmatprep.mubr.f32.mxu0 0.0
  %259 = vmatmul.mubr.f32.gmra.mrb[0].mxu0 %v33
  %v260 = vpop.f32.mrb[0].mxu0
  %v261 = vadd.f32 0.0, %v260
  %v262 = vpop.f32.mrb[0].mxu0
  %v263 = vadd.f32 0.0, %v262
  %264 = vdwg.mxu0
  %265 = vmatprep.subr.mxu0 %v181
  %266 = vmatpush1.msra.mxu0 %v180
  %267 = vmatprep.subr.mxu0 %v185
  %268 = vmatpush1.msra.mxu0 %v184
  %269 = vmatprep.subr.mxu0 %v189
  %270 = vmatpush1.msra.mxu0 %v188
  %271 = vmatprep.subr.mxu0 %v193
  %272 = vmatpush1.msra.mxu0 %v192
  %273 = vmatprep.subr.mxu0 0.0
  %274 = vmatpush1.msra.mxu0 0.0
  %275 = vmatprep.subr.mxu0 0.0
  %276 = vmatpush1.msra.mxu0 0.0
  %277 = vmatprep.subr.mxu0 0.0
  %278 = vmatpush1.msra.mxu0 0.0
  %279 = vmatprep.subr.mxu0 0.0
  %280 = vmatpush1.msra.mxu0 0.0
  %281 = vmatprep.subr.mxu0 0.0
  %282 = vmatpush1.msra.mxu0 0.0
  %283 = vmatprep.subr.mxu0 0.0
  %284 = vmatpush1.msra.mxu0 0.0
  %285 = vmatprep.subr.mxu0 0.0
  %286 = vmatpush1.msra.mxu0 0.0
  %287 = vmatprep.subr.mxu0 0.0
  %288 = vmatpush1.msra.mxu0 0.0
  %289 = vmatprep.subr.mxu0 0.0
  %290 = vmatpush1.msra.mxu0 0.0
  %291 = vmatprep.subr.mxu0 0.0
  %292 = vmatpush1.msra.mxu0 0.0
  %293 = vmatprep.subr.mxu0 0.0
  %294 = vmatpush1.msra.mxu0 0.0
  %295 = vmatprep.subr.mxu0 0.0
  %296 = vmatpush1.msra.mxu0 0.0
  %297 = vmatprep.subr.mxu0 0.0
  %298 = vmatpush1.msra.mxu0 0.0
  %299 = vmatprep.subr.mxu0 0.0
  %300 = vmatpush1.msra.mxu0 0.0
  %301 = vmatprep.subr.mxu0 0.0
  %302 = vmatpush1.msra.mxu0 0.0
  %303 = vmatprep.subr.mxu0 0.0
  %304 = vmatpush1.msra.mxu0 0.0
  %305 = vmatprep.subr.mxu0 0.0
  %306 = vmatpush1.msra.mxu0 0.0
  %307 = vmatprep.subr.mxu0 0.0
  %308 = vmatpush1.msra.mxu0 0.0
  %309 = vmatprep.subr.mxu0 0.0
  %310 = vmatpush1.msra.mxu0 0.0
  %311 = vmatprep.subr.mxu0 0.0
  %312 = vmatpush1.msra.mxu0 0.0
  %313 = vmatprep.subr.mxu0 0.0
  %314 = vmatpush1.msra.mxu0 0.0
  %315 = vmatprep.subr.mxu0 0.0
  %316 = vmatpush1.msra.mxu0 0.0
  %317 = vmatprep.subr.mxu0 0.0
  %318 = vmatpush1.msra.mxu0 0.0
  %319 = vmatprep.subr.mxu0 0.0
  %320 = vmatpush1.msra.mxu0 0.0
  %321 = vmatprep.subr.mxu0 0.0
  %322 = vmatpush1.msra.mxu0 0.0
  %323 = vmatprep.subr.mxu0 0.0
  %324 = vmatpush1.msra.mxu0 0.0
  %325 = vmatprep.subr.mxu0 0.0
  %326 = vmatpush1.msra.mxu0 0.0
  %327 = vmatprep.subr.mxu0 0.0
  %328 = vmatpush1.msra.mxu0 0.0
  %329 = vmatprep.mubr.f32.mxu0 0.0
  %330 = vmatmul.mubr.f32.gmra.mrb[0].mxu0 %v33
  %v331 = vpop.f32.mrb[0].mxu0
  %v332 = vadd.f32 0.0, %v331
  %v333 = vpop.f32.mrb[0].mxu0
  %v334 = vadd.f32 0.0, %v333
  %335 = vdwg.mxu0
  %v336 = vmax.f32 %v102, %v261
  %v337 = vmax.f32 %v104, %v263
  %v338 = vmax.f32 %v173, %v332
  %v339 = vmax.f32 %v175, %v334
  %s340 = scalar_lea.vmem %s0, 256
  %v341 = vld [vmem:[%s340] sm:$0xff]
  %v342 = vld [vmem:[%s340 + $0x8] sm:$0xff]
  %v343 = vld [vmem:[%s340 + $0x10] sm:$0xff]
  %v344 = vld [vmem:[%s340 + $0x18] sm:$0xff]
  %v345 = vld [vmem:[%s340 + $0x20] sm:$0xff]
  %v346 = vld [vmem:[%s340 + $0x28] sm:$0xff]
  %v347 = vld [vmem:[%s340 + $0x30] sm:$0xff]
  %v348 = vld [vmem:[%s340 + $0x38] sm:$0xff]
  %v349 = vld [vmem:[%s340 + $0x40] sm:$0xff]
  %v350 = vld [vmem:[%s340 + $0x48] sm:$0xff]
  %v351 = vld [vmem:[%s340 + $0x50] sm:$0xff]
  %v352 = vld [vmem:[%s340 + $0x58] sm:$0xff]
  %v353 = vld [vmem:[%s340 + $0x60] sm:$0xff]
  %v354 = vld [vmem:[%s340 + $0x68] sm:$0xff]
  %v355 = vld [vmem:[%s340 + $0x70] sm:$0xff]
  %v356 = vld [vmem:[%s340 + $0x78] sm:$0xff]
  %357 = vmatprep.subr.mxu0 %v342
  %358 = vmatpush1.msra.mxu0 %v341
  %359 = vmatprep.subr.mxu0 %v346
  %360 = vmatpush1.msra.mxu0 %v345
  %361 = vmatprep.subr.mxu0 %v350
  %362 = vmatpush1.msra.mxu0 %v349
  %363 = vmatprep.subr.mxu0 %v354
  %364 = vmatpush1.msra.mxu0 %v353
  %365 = vmatprep.subr.mxu0 0.0
  %366 = vmatpush1.msra.mxu0 0.0
  %367 = vmatprep.subr.mxu0 0.0
  %368 = vmatpush1.msra.mxu0 0.0
  %369 = vmatprep.subr.mxu0 0.0
  %370 = vmatpush1.msra.mxu0 0.0
  %371 = vmatprep.subr.mxu0 0.0
  %372 = vmatpush1.msra.mxu0 0.0
  %373 = vmatprep.subr.mxu0 0.0
  %374 = vmatpush1.msra.mxu0 0.0
  %375 = vmatprep.subr.mxu0 0.0
  %376 = vmatpush1.msra.mxu0 0.0
  %377 = vmatprep.subr.mxu0 0.0
  %378 = vmatpush1.msra.mxu0 0.0
  %379 = vmatprep.subr.mxu0 0.0
  %380 = vmatpush1.msra.mxu0 0.0
  %381 = vmatprep.subr.mxu0 0.0
  %382 = vmatpush1.msra.mxu0 0.0
  %383 = vmatprep.subr.mxu0 0.0
  %384 = vmatpush1.msra.mxu0 0.0
  %385 = vmatprep.subr.mxu0 0.0
  %386 = vmatpush1.msra.mxu0 0.0
  %387 = vmatprep.subr.mxu0 0.0
  %388 = vmatpush1.msra.mxu0 0.0
  %389 = vmatprep.subr.mxu0 0.0
  %390 = vmatpush1.msra.mxu0 0.0
  %391 = vmatprep.subr.mxu0 0.0
  %392 = vmatpush1.msra.mxu0 0.0
  %393 = vmatprep.subr.mxu0 0.0
  %394 = vmatpush1.msra.mxu0 0.0
  %395 = vmatprep.subr.mxu0 0.0
  %396 = vmatpush1.msra.mxu0 0.0
  %397 = vmatprep.subr.mxu0 0.0
  %398 = vmatpush1.msra.mxu0 0.0
  %399 = vmatprep.subr.mxu0 0.0
  %400 = vmatpush1.msra.mxu0 0.0
  %401 = vmatprep.subr.mxu0 0.0
  %402 = vmatpush1.msra.mxu0 0.0
  %403 = vmatprep.subr.mxu0 0.0
  %404 = vmatpush1.msra.mxu0 0.0
  %405 = vmatprep.subr.mxu0 0.0
  %406 = vmatpush1.msra.mxu0 0.0
  %407 = vmatprep.subr.mxu0 0.0
  %408 = vmatpush1.msra.mxu0 0.0
  %409 = vmatprep.subr.mxu0 0.0
  %410 = vmatpush1.msra.mxu0 0.0
  %411 = vmatprep.subr.mxu0 0.0
  %412 = vmatpush1.msra.mxu0 0.0
  %413 = vmatprep.subr.mxu0 0.0
  %414 = vmatpush1.msra.mxu0 0.0
  %415 = vmatprep.subr.mxu0 0.0
  %416 = vmatpush1.msra.mxu0 0.0
  %417 = vmatprep.subr.mxu0 0.0
  %418 = vmatpush1.msra.mxu0 0.0
  %419 = vmatprep.subr.mxu0 0.0
  %420 = vmatpush1.msra.mxu0 0.0
  %421 = vmatprep.mubr.f32.mxu0 0.0
  %422 = vmatmul.mubr.f32.gmra.mrb[0].mxu0 %v33
  %v423 = vpop.f32.mrb[0].mxu0
  %v424 = vadd.f32 0.0, %v423
  %v425 = vpop.f32.mrb[0].mxu0
  %v426 = vadd.f32 0.0, %v425
  %427 = vdwg.mxu0
  %428 = vmatprep.subr.mxu0 %v344
  %429 = vmatpush1.msra.mxu0 %v343
  %430 = vmatprep.subr.mxu0 %v348
  %431 = vmatpush1.msra.mxu0 %v347
  %432 = vmatprep.subr.mxu0 %v352
  %433 = vmatpush1.msra.mxu0 %v351
  %434 = vmatprep.subr.mxu0 %v356
  %435 = vmatpush1.msra.mxu0 %v355
  %436 = vmatprep.subr.mxu0 0.0
  %437 = vmatpush1.msra.mxu0 0.0
  %438 = vmatprep.subr.mxu0 0.0
  %439 = vmatpush1.msra.mxu0 0.0
  %440 = vmatprep.subr.mxu0 0.0
  %441 = vmatpush1.msra.mxu0 0.0
  %442 = vmatprep.subr.mxu0 0.0
  %443 = vmatpush1.msra.mxu0 0.0
  %444 = vmatprep.subr.mxu0 0.0
  %445 = vmatpush1.msra.mxu0 0.0
  %446 = vmatprep.subr.mxu0 0.0
  %447 = vmatpush1.msra.mxu0 0.0
  %448 = vmatprep.subr.mxu0 0.0
  %449 = vmatpush1.msra.mxu0 0.0
  %450 = vmatprep.subr.mxu0 0.0
  %451 = vmatpush1.msra.mxu0 0.0
  %452 = vmatprep.subr.mxu0 0.0
  %453 = vmatpush1.msra.mxu0 0.0
  %454 = vmatprep.subr.mxu0 0.0
  %455 = vmatpush1.msra.mxu0 0.0
  %456 = vmatprep.subr.mxu0 0.0
  %457 = vmatpush1.msra.mxu0 0.0
  %458 = vmatprep.subr.mxu0 0.0
  %459 = vmatpush1.msra.mxu0 0.0
  %460 = vmatprep.subr.mxu0 0.0
  %461 = vmatpush1.msra.mxu0 0.0
  %462 = vmatprep.subr.mxu0 0.0
  %463 = vmatpush1.msra.mxu0 0.0
  %464 = vmatprep.subr.mxu0 0.0
  %465 = vmatpush1.msra.mxu0 0.0
  %466 = vmatprep.subr.mxu0 0.0
  %467 = vmatpush1.msra.mxu0 0.0
  %468 = vmatprep.subr.mxu0 0.0
  %469 = vmatpush1.msra.mxu0 0.0
  %470 = vmatprep.subr.mxu0 0.0
  %471 = vmatpush1.msra.mxu0 0.0
  %472 = vmatprep.subr.mxu0 0.0
  %473 = vmatpush1.msra.mxu0 0.0
  %474 = vmatprep.subr.mxu0 0.0
  %475 = vmatpush1.msra.mxu0 0.0
  %476 = vmatprep.subr.mxu0 0.0
  %477 = vmatpush1.msra.mxu0 0.0
  %478 = vmatprep.subr.mxu0 0.0
  %479 = vmatpush1.msra.mxu0 0.0
  %480 = vmatprep.subr.mxu0 0.0
  %481 = vmatpush1.msra.mxu0 0.0
  %482 = vmatprep.subr.mxu0 0.0
  %483 = vmatpush1.msra.mxu0 0.0
  %484 = vmatprep.subr.mxu0 0.0
  %485 = vmatpush1.msra.mxu0 0.0
  %486 = vmatprep.subr.mxu0 0.0
  %487 = vmatpush1.msra.mxu0 0.0
  %488 = vmatprep.subr.mxu0 0.0
  %489 = vmatpush1.msra.mxu0 0.0
  %490 = vmatprep.subr.mxu0 0.0
  %491 = vmatpush1.msra.mxu0 0.0
  %492 = vmatprep.mubr.f32.mxu0 0.0
  %493 = vmatmul.mubr.f32.gmra.mrb[0].mxu0 %v33
  %v494 = vpop.f32.mrb[0].mxu0
  %v495 = vadd.f32 0.0, %v494
  %v496 = vpop.f32.mrb[0].mxu0
  %v497 = vadd.f32 0.0, %v496
  %498 = vdwg.mxu0
  %v499 = vmax.f32 %v336, %v424
  %v500 = vmax.f32 %v337, %v426
  %v501 = vmax.f32 %v338, %v495
  %v502 = vmax.f32 %v339, %v497
  %s503 = scalar_lea.vmem %s0, 384
  %v504 = vld [vmem:[%s503] sm:$0xff]
  %v505 = vld [vmem:[%s503 + $0x8] sm:$0xff]
  %v506 = vld [vmem:[%s503 + $0x10] sm:$0xff]
  %v507 = vld [vmem:[%s503 + $0x18] sm:$0xff]
  %v508 = vld [vmem:[%s503 + $0x20] sm:$0xff]
  %v509 = vld [vmem:[%s503 + $0x28] sm:$0xff]
  %v510 = vld [vmem:[%s503 + $0x30] sm:$0xff]
  %v511 = vld [vmem:[%s503 + $0x38] sm:$0xff]
  %v512 = vld [vmem:[%s503 + $0x40] sm:$0xff]
  %v513 = vld [vmem:[%s503 + $0x48] sm:$0xff]
  %v514 = vld [vmem:[%s503 + $0x50] sm:$0xff]
  %v515 = vld [vmem:[%s503 + $0x58] sm:$0xff]
  %v516 = vld [vmem:[%s503 + $0x60] sm:$0xff]
  %v517 = vld [vmem:[%s503 + $0x68] sm:$0xff]
  %v518 = vld [vmem:[%s503 + $0x70] sm:$0xff]
  %v519 = vld [vmem:[%s503 + $0x78] sm:$0xff]
  %520 = vmatprep.subr.mxu0 %v505
  %521 = vmatpush1.msra.mxu0 %v504
  %522 = vmatprep.subr.mxu0 %v509
  %523 = vmatpush1.msra.mxu0 %v508
  %524 = vmatprep.subr.mxu0 %v513
  %525 = vmatpush1.msra.mxu0 %v512
  %526 = vmatprep.subr.mxu0 %v517
  %527 = vmatpush1.msra.mxu0 %v516
  %528 = vmatprep.subr.mxu0 0.0
  %529 = vmatpush1.msra.mxu0 0.0
  %530 = vmatprep.subr.mxu0 0.0
  %531 = vmatpush1.msra.mxu0 0.0
  %532 = vmatprep.subr.mxu0 0.0
  %533 = vmatpush1.msra.mxu0 0.0
  %534 = vmatprep.subr.mxu0 0.0
  %535 = vmatpush1.msra.mxu0 0.0
  %536 = vmatprep.subr.mxu0 0.0
  %537 = vmatpush1.msra.mxu0 0.0
  %538 = vmatprep.subr.mxu0 0.0
  %539 = vmatpush1.msra.mxu0 0.0
  %540 = vmatprep.subr.mxu0 0.0
  %541 = vmatpush1.msra.mxu0 0.0
  %542 = vmatprep.subr.mxu0 0.0
  %543 = vmatpush1.msra.mxu0 0.0
  %544 = vmatprep.subr.mxu0 0.0
  %545 = vmatpush1.msra.mxu0 0.0
  %546 = vmatprep.subr.mxu0 0.0
  %547 = vmatpush1.msra.mxu0 0.0
  %548 = vmatprep.subr.mxu0 0.0
  %549 = vmatpush1.msra.mxu0 0.0
  %550 = vmatprep.subr.mxu0 0.0
  %551 = vmatpush1.msra.mxu0 0.0
  %552 = vmatprep.subr.mxu0 0.0
  %553 = vmatpush1.msra.mxu0 0.0
  %554 = vmatprep.subr.mxu0 0.0
  %555 = vmatpush1.msra.mxu0 0.0
  %556 = vmatprep.subr.mxu0 0.0
  %557 = vmatpush1.msra.mxu0 0.0
  %558 = vmatprep.subr.mxu0 0.0
  %559 = vmatpush1.msra.mxu0 0.0
  %560 = vmatprep.subr.mxu0 0.0
  %561 = vmatpush1.msra.mxu0 0.0
  %562 = vmatprep.subr.mxu0 0.0
  %563 = vmatpush1.msra.mxu0 0.0
  %564 = vmatprep.subr.mxu0 0.0
  %565 = vmatpush1.msra.mxu0 0.0
  %566 = vmatprep.subr.mxu0 0.0
  %567 = vmatpush1.msra.mxu0 0.0
  %568 = vmatprep.subr.mxu0 0.0
  %569 = vmatpush1.msra.mxu0 0.0
  %570 = vmatprep.subr.mxu0 0.0
  %571 = vmatpush1.msra.mxu0 0.0
  %572 = vmatprep.subr.mxu0 0.0
  %573 = vmatpush1.msra.mxu0 0.0
  %574 = vmatprep.subr.mxu0 0.0
  %575 = vmatpush1.msra.mxu0 0.0
  %576 = vmatprep.subr.mxu0 0.0
  %577 = vmatpush1.msra.mxu0 0.0
  %578 = vmatprep.subr.mxu0 0.0
  %579 = vmatpush1.msra.mxu0 0.0
  %580 = vmatprep.subr.mxu0 0.0
  %581 = vmatpush1.msra.mxu0 0.0
  %582 = vmatprep.subr.mxu0 0.0
  %583 = vmatpush1.msra.mxu0 0.0
  %584 = vmatprep.mubr.f32.mxu0 0.0
  %585 = vmatmul.mubr.f32.gmra.mrb[0].mxu0 %v33
  %v586 = vpop.f32.mrb[0].mxu0
  %v587 = vadd.f32 0.0, %v586
  %v588 = vpop.f32.mrb[0].mxu0
  %v589 = vadd.f32 0.0, %v588
  %590 = vdwg.mxu0
  %591 = vmatprep.subr.mxu0 %v507
  %592 = vmatpush1.msra.mxu0 %v506
  %593 = vmatprep.subr.mxu0 %v511
  %594 = vmatpush1.msra.mxu0 %v510
  %595 = vmatprep.subr.mxu0 %v515
  %596 = vmatpush1.msra.mxu0 %v514
  %597 = vmatprep.subr.mxu0 %v519
  %598 = vmatpush1.msra.mxu0 %v518
  %599 = vmatprep.subr.mxu0 0.0
  %600 = vmatpush1.msra.mxu0 0.0
  %601 = vmatprep.subr.mxu0 0.0
  %602 = vmatpush1.msra.mxu0 0.0
  %603 = vmatprep.subr.mxu0 0.0
  %604 = vmatpush1.msra.mxu0 0.0
  %605 = vmatprep.subr.mxu0 0.0
  %606 = vmatpush1.msra.mxu0 0.0
  %607 = vmatprep.subr.mxu0 0.0
  %608 = vmatpush1.msra.mxu0 0.0
  %609 = vmatprep.subr.mxu0 0.0
  %610 = vmatpush1.msra.mxu0 0.0
  %611 = vmatprep.subr.mxu0 0.0
  %612 = vmatpush1.msra.mxu0 0.0
  %613 = vmatprep.subr.mxu0 0.0
  %614 = vmatpush1.msra.mxu0 0.0
  %615 = vmatprep.subr.mxu0 0.0
  %616 = vmatpush1.msra.mxu0 0.0
  %617 = vmatprep.subr.mxu0 0.0
  %618 = vmatpush1.msra.mxu0 0.0
  %619 = vmatprep.subr.mxu0 0.0
  %620 = vmatpush1.msra.mxu0 0.0
  %621 = vmatprep.subr.mxu0 0.0
  %622 = vmatpush1.msra.mxu0 0.0
  %623 = vmatprep.subr.mxu0 0.0
  %624 = vmatpush1.msra.mxu0 0.0
  %625 = vmatprep.subr.mxu0 0.0
  %626 = vmatpush1.msra.mxu0 0.0
  %627 = vmatprep.subr.mxu0 0.0
  %628 = vmatpush1.msra.mxu0 0.0
  %629 = vmatprep.subr.mxu0 0.0
  %630 = vmatpush1.msra.mxu0 0.0
  %631 = vmatprep.subr.mxu0 0.0
  %632 = vmatpush1.msra.mxu0 0.0
  %633 = vmatprep.subr.mxu0 0.0
  %634 = vmatpush1.msra.mxu0 0.0
  %635 = vmatprep.subr.mxu0 0.0
  %636 = vmatpush1.msra.mxu0 0.0
  %637 = vmatprep.subr.mxu0 0.0
  %638 = vmatpush1.msra.mxu0 0.0
  %639 = vmatprep.subr.mxu0 0.0
  %640 = vmatpush1.msra.mxu0 0.0
  %641 = vmatprep.subr.mxu0 0.0
  %642 = vmatpush1.msra.mxu0 0.0
  %643 = vmatprep.subr.mxu0 0.0
  %644 = vmatpush1.msra.mxu0 0.0
  %645 = vmatprep.subr.mxu0 0.0
  %646 = vmatpush1.msra.mxu0 0.0
  %647 = vmatprep.subr.mxu0 0.0
  %648 = vmatpush1.msra.mxu0 0.0
  %649 = vmatprep.subr.mxu0 0.0
  %650 = vmatpush1.msra.mxu0 0.0
  %651 = vmatprep.subr.mxu0 0.0
  %652 = vmatpush1.msra.mxu0 0.0
  %653 = vmatprep.subr.mxu0 0.0
  %654 = vmatpush1.msra.mxu0 0.0
  %655 = vmatprep.mubr.f32.mxu0 0.0
  %656 = vmatmul.mubr.f32.gmra.mrb[0].mxu0 %v33
  %v657 = vpop.f32.mrb[0].mxu0
  %v658 = vadd.f32 0.0, %v657
  %v659 = vpop.f32.mrb[0].mxu0
  %v660 = vadd.f32 0.0, %v659
  %661 = vdwg.mxu0
  %v662 = vmax.f32 %v499, %v587
  %v663 = vmax.f32 %v500, %v589
  %v664 = vmax.f32 %v501, %v658
  %v665 = vmax.f32 %v502, %v660
  %v666 = vld [vmem:[%s2] sm:$0x3f]
  %668 = vset.pattern.permute.xlu0 0
  %669 = vperm.xlu0 %668, %v666
  %v670 = vpop.permute.xlu0 %669
  %v672 = vadd.f32 %v662, %v670
  %v673 = vadd.f32 %v663, %v670
  %v674 = vadd.f32 %v664, %v670
  %v675 = vadd.f32 %v665, %v670
  %v676 = vmax.f32 %v672, 0.0
  %v677 = vmax.f32 %v673, 0.0
  %v678 = vmax.f32 %v674, 0.0
  %v679 = vmax.f32 %v675, 0.0
  %680 = vst [vmem:[%s3] sm:$0x3f] %v676
  %681 = vst [vmem:[%s3 + $0x8] sm:$0x3f] %v677
  %682 = vst [vmem:[%s3 + $0x10] sm:$0x3f] %v678
  %vm683 = vcmask 62464
  %684 = vst.msk [vmem:[%s3 + $0x18] sm:$0x3f] %vm683, %v679
  // Predicated region
  $region14: #{net_forward.3} parent=0 // pred_check
    _
  $region15: #{net_forward.3} parent=0 // pred_check_branch
    %686 = sbr.rel (0) target = $region17
  $region16: #{net_forward.3} parent=0 // pred_region
    _
  $region17: #{net_forward.3} parent=0 // pred_fallthru
    _
  // Predicated region
  $region18: #{net_forward.3} parent=0 // pred_check
    _
  $region19: #{net_forward.3} parent=0 // pred_check_branch
    %688 = sbr.rel (0) target = $region21
  $region20: #{net_forward.3} parent=0 // pred_region
    _
  $region21: #{net_forward.3} parent=0 // pred_fallthru
    _

// kernel: net_forward.4
$region0: #{net_forward.4}
  #allocation0 [shape = 'u32[]', space=smem, size = 0x4, offset = 0x4, fixed_abs, tag = 'smem constant byte address 0x4 - core index']
  #allocation1 [shape = 'u32[144,128]{1,0:T(1,128)}', space=vmem, size = 0x12000, scoped, tag = 'internal scratch']
  %s0 = inlined_call_operand.vmem [shape: f32[4,152,50], index: 0, kind: input, shape index: {}]
  %s1 = inlined_call_operand.vmem [shape: f32[16,152], index: 1, kind: input, shape index: {}]
  %s2 = inlined_call_operand.vmem [shape: f32[16,1], index: 2, kind: input, shape index: {}]
  %s3 = inlined_call_operand.vmem [shape: f32[16,50], index: 3, kind: output, shape index: {}]
  %s4 = sld [smem:[#allocation0]]
  $region22: #{net_forward.4} parent=0
    _
  %s6 = ssub.s32 1, %s4
  %s7 = scalar_select 0, %s6, %s4
  // Predicated region
  $region2: #{net_forward.4} parent=0 // pred_check
    _
  $region3: #{net_forward.4} parent=0 // pred_check_branch
    %9 = sbr.rel (0) target = $region5
  $region4: #{net_forward.4} parent=0 // pred_region
    _
  $region5: #{net_forward.4} parent=0 // pred_fallthru
    _
  // Predicated region
  $region6: #{net_forward.4} parent=0 // pred_check
    _
  $region7: #{net_forward.4} parent=0 // pred_check_branch
    %11 = sbr.rel (0) target = $region9
  $region8: #{net_forward.4} parent=0 // pred_region
    _
  $region9: #{net_forward.4} parent=0 // pred_fallthru
    _
  // Predicated region
  $region10: #{net_forward.4} parent=0 // pred_check
    _
  $region11: #{net_forward.4} parent=0 // pred_check_branch
    %13 = sbr.rel (0) target = $region13
  $region12: #{net_forward.4} parent=0 // pred_region
    _
  $region13: #{net_forward.4} parent=0 // pred_fallthru
    _
  %v14 = vld [vmem:[%s1] sm:$0xff]
  %v15 = vld [vmem:[%s1 + $0x8] sm:$0xff]
  %v16 = vld [vmem:[%s1 + $0x10] sm:$0xff]
  %v17 = vld [vmem:[%s1 + $0x18] sm:$0xff]
  %v18 = vld [vmem:[%s0] sm:$0xff]
  %v19 = vld [vmem:[%s0 + $0x8] sm:$0xff]
  %v20 = vld [vmem:[%s0 + $0x10] sm:$0xff]
  %v21 = vld [vmem:[%s0 + $0x18] sm:$0xff]
  %v22 = vld [vmem:[%s0 + $0x20] sm:$0xff]
  %v23 = vld [vmem:[%s0 + $0x28] sm:$0xff]
  %v24 = vld [vmem:[%s0 + $0x30] sm:$0xff]
  %v25 = vld [vmem:[%s0 + $0x38] sm:$0xff]
  %v26 = vld [vmem:[%s0 + $0x40] sm:$0xff]
  %v27 = vld [vmem:[%s0 + $0x48] sm:$0xff]
  %v28 = vld [vmem:[%s0 + $0x50] sm:$0xff]
  %v29 = vld [vmem:[%s0 + $0x58] sm:$0xff]
  %v30 = vld [vmem:[%s0 + $0x60] sm:$0xff]
  %v31 = vld [vmem:[%s0 + $0x68] sm:$0xff]
  %v32 = vld [vmem:[%s0 + $0x70] sm:$0xff]
  %v33 = vld [vmem:[%s0 + $0x78] sm:$0xff]
  %v34 = vld [vmem:[%s0 + $0x80] sm:$0xff]
  %v35 = vld [vmem:[%s0 + $0x88] sm:$0xff]
  %v36 = vld [vmem:[%s0 + $0x90] sm:$0xff]
  %vm37 = vcmask 195584
  %v39 = vsel %vm37, %v15, 0
  %v42 = vsel %vm37, %v17, 0
  %44 = vmatprep.subr.mxu0 0.0
  %45 = vmatpush1.msra.mxu0 %v18
  %46 = vmatprep.subr.mxu0 0.0
  %47 = vmatpush1.msra.mxu0 %v19
  %48 = vmatprep.subr.mxu0 0.0
  %49 = vmatpush1.msra.mxu0 %v20
  %50 = vmatprep.subr.mxu0 0.0
  %51 = vmatpush1.msra.mxu0 %v21
  %52 = vmatprep.subr.mxu0 0.0
  %53 = vmatpush1.msra.mxu0 %v22
  %54 = vmatprep.subr.mxu0 0.0
  %55 = vmatpush1.msra.mxu0 %v23
  %56 = vmatprep.subr.mxu0 0.0
  %57 = vmatpush1.msra.mxu0 %v24
  %58 = vmatprep.subr.mxu0 0.0
  %59 = vmatpush1.msra.mxu0 %v25
  %60 = vmatprep.subr.mxu0 0.0
  %61 = vmatpush1.msra.mxu0 %v26
  %62 = vmatprep.subr.mxu0 0.0
  %63 = vmatpush1.msra.mxu0 %v27
  %64 = vmatprep.subr.mxu0 0.0
  %65 = vmatpush1.msra.mxu0 %v28
  %66 = vmatprep.subr.mxu0 0.0
  %67 = vmatpush1.msra.mxu0 %v29
  %68 = vmatprep.subr.mxu0 0.0
  %69 = vmatpush1.msra.mxu0 %v30
  %70 = vmatprep.subr.mxu0 0.0
  %71 = vmatpush1.msra.mxu0 %v31
  %72 = vmatprep.subr.mxu0 0.0
  %73 = vmatpush1.msra.mxu0 %v32
  %74 = vmatprep.subr.mxu0 0.0
  %75 = vmatpush1.msra.mxu0 %v33
  %76 = vmatprep.subr.mxu0 0.0
  %77 = vmatpush1.msra.mxu0 %v34
  %78 = vmatprep.subr.mxu0 0.0
  %79 = vmatpush1.msra.mxu0 %v35
  %80 = vmatprep.subr.mxu0 0.0
  %81 = vmatpush1.msra.mxu0 %v36
  %82 = vmatprep.subr.mxu0 0.0
  %83 = vmatpush1.msra.mxu0 0.0
  %84 = vmatprep.subr.mxu0 0.0
  %85 = vmatpush1.msra.mxu0 0.0
  %86 = vmatprep.subr.mxu0 0.0
  %87 = vmatpush1.msra.mxu0 0.0
  %88 = vmatprep.subr.mxu0 0.0
  %89 = vmatpush1.msra.mxu0 0.0
  %90 = vmatprep.subr.mxu0 0.0
  %91 = vmatpush1.msra.mxu0 0.0
  %92 = vmatprep.subr.mxu0 0.0
  %93 = vmatpush1.msra.mxu0 0.0
  %94 = vmatprep.subr.mxu0 0.0
  %95 = vmatpush1.msra.mxu0 0.0
  %96 = vmatprep.subr.mxu0 0.0
  %97 = vmatpush1.msra.mxu0 0.0
  %98 = vmatprep.subr.mxu0 0.0
  %99 = vmatpush1.msra.mxu0 0.0
  %100 = vmatprep.subr.mxu0 0.0
  %101 = vmatpush1.msra.mxu0 0.0
  %102 = vmatprep.subr.mxu0 0.0
  %103 = vmatpush1.msra.mxu0 0.0
  %104 = vmatprep.subr.mxu0 0.0
  %105 = vmatpush1.msra.mxu0 0.0
  %106 = vmatprep.subr.mxu0 0.0
  %107 = vmatpush1.msra.mxu0 0.0
  %108 = vmatprep.mubr.f32.mxu0 %v39
  %109 = vmatmul.mubr.f32.gmra.mrb[0].mxu0 %v14
  %v110 = vpop.f32.mrb[0].mxu0
  %v111 = vadd.f32 0.0, %v110
  %v112 = vpop.f32.mrb[0].mxu0
  %113 = vmatprep.mubr.f32.mxu0 %v42
  %114 = vmatmul.mubr.f32.gmra.mrb[0].mxu0 %v16
  %v115 = vpop.f32.mrb[0].mxu0
  %v116 = vadd.f32 0.0, %v115
  %v117 = vpop.f32.mrb[0].mxu0
  %118 = vdwg.mxu0
  %s119 = scalar_lea.vmem %s0, 152
  %v120 = vld [vmem:[%s119] sm:$0xff]
  %v121 = vld [vmem:[%s119 + $0x8] sm:$0xff]
  %v122 = vld [vmem:[%s119 + $0x10] sm:$0xff]
  %v123 = vld [vmem:[%s119 + $0x18] sm:$0xff]
  %v124 = vld [vmem:[%s119 + $0x20] sm:$0xff]
  %v125 = vld [vmem:[%s119 + $0x28] sm:$0xff]
  %v126 = vld [vmem:[%s119 + $0x30] sm:$0xff]
  %v127 = vld [vmem:[%s119 + $0x38] sm:$0xff]
  %v128 = vld [vmem:[%s119 + $0x40] sm:$0xff]
  %v129 = vld [vmem:[%s119 + $0x48] sm:$0xff]
  %v130 = vld [vmem:[%s119 + $0x50] sm:$0xff]
  %v131 = vld [vmem:[%s119 + $0x58] sm:$0xff]
  %v132 = vld [vmem:[%s119 + $0x60] sm:$0xff]
  %v133 = vld [vmem:[%s119 + $0x68] sm:$0xff]
  %v134 = vld [vmem:[%s119 + $0x70] sm:$0xff]
  %v135 = vld [vmem:[%s119 + $0x78] sm:$0xff]
  %v136 = vld [vmem:[%s119 + $0x80] sm:$0xff]
  %v137 = vld [vmem:[%s119 + $0x88] sm:$0xff]
  %v138 = vld [vmem:[%s119 + $0x90] sm:$0xff]
  %139 = vmatprep.subr.mxu0 0.0
  %140 = vmatpush1.msra.mxu0 %v120
  %141 = vmatprep.subr.mxu0 0.0
  %142 = vmatpush1.msra.mxu0 %v121
  %143 = vmatprep.subr.mxu0 0.0
  %144 = vmatpush1.msra.mxu0 %v122
  %145 = vmatprep.subr.mxu0 0.0
  %146 = vmatpush1.msra.mxu0 %v123
  %147 = vmatprep.subr.mxu0 0.0
  %148 = vmatpush1.msra.mxu0 %v124
  %149 = vmatprep.subr.mxu0 0.0
  %150 = vmatpush1.msra.mxu0 %v125
  %151 = vmatprep.subr.mxu0 0.0
  %152 = vmatpush1.msra.mxu0 %v126
  %153 = vmatprep.subr.mxu0 0.0
  %154 = vmatpush1.msra.mxu0 %v127
  %155 = vmatprep.subr.mxu0 0.0
  %156 = vmatpush1.msra.mxu0 %v128
  %157 = vmatprep.subr.mxu0 0.0
  %158 = vmatpush1.msra.mxu0 %v129
  %159 = vmatprep.subr.mxu0 0.0
  %160 = vmatpush1.msra.mxu0 %v130
  %161 = vmatprep.subr.mxu0 0.0
  %162 = vmatpush1.msra.mxu0 %v131
  %163 = vmatprep.subr.mxu0 0.0
  %164 = vmatpush1.msra.mxu0 %v132
  %165 = vmatprep.subr.mxu0 0.0
  %166 = vmatpush1.msra.mxu0 %v133
  %167 = vmatprep.subr.mxu0 0.0
  %168 = vmatpush1.msra.mxu0 %v134
  %169 = vmatprep.subr.mxu0 0.0
  %170 = vmatpush1.msra.mxu0 %v135
  %171 = vmatprep.subr.mxu0 0.0
  %172 = vmatpush1.msra.mxu0 %v136
  %173 = vmatprep.subr.mxu0 0.0
  %174 = vmatpush1.msra.mxu0 %v137
  %175 = vmatprep.subr.mxu0 0.0
  %176 = vmatpush1.msra.mxu0 %v138
  %177 = vmatprep.subr.mxu0 0.0
  %178 = vmatpush1.msra.mxu0 0.0
  %179 = vmatprep.subr.mxu0 0.0
  %180 = vmatpush1.msra.mxu0 0.0
  %181 = vmatprep.subr.mxu0 0.0
  %182 = vmatpush1.msra.mxu0 0.0
  %183 = vmatprep.subr.mxu0 0.0
  %184 = vmatpush1.msra.mxu0 0.0
  %185 = vmatprep.subr.mxu0 0.0
  %186 = vmatpush1.msra.mxu0 0.0
  %187 = vmatprep.subr.mxu0 0.0
  %188 = vmatpush1.msra.mxu0 0.0
  %189 = vmatprep.subr.mxu0 0.0
  %190 = vmatpush1.msra.mxu0 0.0
  %191 = vmatprep.subr.mxu0 0.0
  %192 = vmatpush1.msra.mxu0 0.0
  %193 = vmatprep.subr.mxu0 0.0
  %194 = vmatpush1.msra.mxu0 0.0
  %195 = vmatprep.subr.mxu0 0.0
  %196 = vmatpush1.msra.mxu0 0.0
  %197 = vmatprep.subr.mxu0 0.0
  %198 = vmatpush1.msra.mxu0 0.0
  %199 = vmatprep.subr.mxu0 0.0
  %200 = vmatpush1.msra.mxu0 0.0
  %201 = vmatprep.subr.mxu0 0.0
  %202 = vmatpush1.msra.mxu0 0.0
  %203 = vmatprep.mubr.f32.mxu0 %v39
  %204 = vmatmul.mubr.f32.gmra.mrb[0].mxu0 %v14
  %v205 = vpop.f32.mrb[0].mxu0
  %v206 = vadd.f32 0.0, %v205
  %v207 = vpop.f32.mrb[0].mxu0
  %208 = vmatprep.mubr.f32.mxu0 %v42
  %209 = vmatmul.mubr.f32.gmra.mrb[0].mxu0 %v16
  %v210 = vpop.f32.mrb[0].mxu0
  %v211 = vadd.f32 0.0, %v210
  %v212 = vpop.f32.mrb[0].mxu0
  %213 = vdwg.mxu0
  %v214 = vmax.f32 %v111, %v206
  %v215 = vmax.f32 %v116, %v211
  %s216 = scalar_lea.vmem %s0, 304
  %v217 = vld [vmem:[%s216] sm:$0xff]
  %v218 = vld [vmem:[%s216 + $0x8] sm:$0xff]
  %v219 = vld [vmem:[%s216 + $0x10] sm:$0xff]
  %v220 = vld [vmem:[%s216 + $0x18] sm:$0xff]
  %v221 = vld [vmem:[%s216 + $0x20] sm:$0xff]
  %v222 = vld [vmem:[%s216 + $0x28] sm:$0xff]
  %v223 = vld [vmem:[%s216 + $0x30] sm:$0xff]
  %v224 = vld [vmem:[%s216 + $0x38] sm:$0xff]
  %v225 = vld [vmem:[%s216 + $0x40] sm:$0xff]
  %v226 = vld [vmem:[%s216 + $0x48] sm:$0xff]
  %v227 = vld [vmem:[%s216 + $0x50] sm:$0xff]
  %v228 = vld [vmem:[%s216 + $0x58] sm:$0xff]
  %v229 = vld [vmem:[%s216 + $0x60] sm:$0xff]
  %v230 = vld [vmem:[%s216 + $0x68] sm:$0xff]
  %v231 = vld [vmem:[%s216 + $0x70] sm:$0xff]
  %v232 = vld [vmem:[%s216 + $0x78] sm:$0xff]
  %v233 = vld [vmem:[%s216 + $0x80] sm:$0xff]
  %v234 = vld [vmem:[%s216 + $0x88] sm:$0xff]
  %v235 = vld [vmem:[%s216 + $0x90] sm:$0xff]
  %236 = vmatprep.subr.mxu0 0.0
  %237 = vmatpush1.msra.mxu0 %v217
  %238 = vmatprep.subr.mxu0 0.0
  %239 = vmatpush1.msra.mxu0 %v218
  %240 = vmatprep.subr.mxu0 0.0
  %241 = vmatpush1.msra.mxu0 %v219
  %242 = vmatprep.subr.mxu0 0.0
  %243 = vmatpush1.msra.mxu0 %v220
  %244 = vmatprep.subr.mxu0 0.0
  %245 = vmatpush1.msra.mxu0 %v221
  %246 = vmatprep.subr.mxu0 0.0
  %247 = vmatpush1.msra.mxu0 %v222
  %248 = vmatprep.subr.mxu0 0.0
  %249 = vmatpush1.msra.mxu0 %v223
  %250 = vmatprep.subr.mxu0 0.0
  %251 = vmatpush1.msra.mxu0 %v224
  %252 = vmatprep.subr.mxu0 0.0
  %253 = vmatpush1.msra.mxu0 %v225
  %254 = vmatprep.subr.mxu0 0.0
  %255 = vmatpush1.msra.mxu0 %v226
  %256 = vmatprep.subr.mxu0 0.0
  %257 = vmatpush1.msra.mxu0 %v227
  %258 = vmatprep.subr.mxu0 0.0
  %259 = vmatpush1.msra.mxu0 %v228
  %260 = vmatprep.subr.mxu0 0.0
  %261 = vmatpush1.msra.mxu0 %v229
  %262 = vmatprep.subr.mxu0 0.0
  %263 = vmatpush1.msra.mxu0 %v230
  %264 = vmatprep.subr.mxu0 0.0
  %265 = vmatpush1.msra.mxu0 %v231
  %266 = vmatprep.subr.mxu0 0.0
  %267 = vmatpush1.msra.mxu0 %v232
  %268 = vmatprep.subr.mxu0 0.0
  %269 = vmatpush1.msra.mxu0 %v233
  %270 = vmatprep.subr.mxu0 0.0
  %271 = vmatpush1.msra.mxu0 %v234
  %272 = vmatprep.subr.mxu0 0.0
  %273 = vmatpush1.msra.mxu0 %v235
  %274 = vmatprep.subr.mxu0 0.0
  %275 = vmatpush1.msra.mxu0 0.0
  %276 = vmatprep.subr.mxu0 0.0
  %277 = vmatpush1.msra.mxu0 0.0
  %278 = vmatprep.subr.mxu0 0.0
  %279 = vmatpush1.msra.mxu0 0.0
  %280 = vmatprep.subr.mxu0 0.0
  %281 = vmatpush1.msra.mxu0 0.0
  %282 = vmatprep.subr.mxu0 0.0
  %283 = vmatpush1.msra.mxu0 0.0
  %284 = vmatprep.subr.mxu0 0.0
  %285 = vmatpush1.msra.mxu0 0.0
  %286 = vmatprep.subr.mxu0 0.0
  %287 = vmatpush1.msra.mxu0 0.0
  %288 = vmatprep.subr.mxu0 0.0
  %289 = vmatpush1.msra.mxu0 0.0
  %290 = vmatprep.subr.mxu0 0.0
  %291 = vmatpush1.msra.mxu0 0.0
  %292 = vmatprep.subr.mxu0 0.0
  %293 = vmatpush1.msra.mxu0 0.0
  %294 = vmatprep.subr.mxu0 0.0
  %295 = vmatpush1.msra.mxu0 0.0
  %296 = vmatprep.subr.mxu0 0.0
  %297 = vmatpush1.msra.mxu0 0.0
  %298 = vmatprep.subr.mxu0 0.0
  %299 = vmatpush1.msra.mxu0 0.0
  %300 = vmatprep.mubr.f32.mxu0 %v39
  %301 = vmatmul.mubr.f32.gmra.mrb[0].mxu0 %v14
  %v302 = vpop.f32.mrb[0].mxu0
  %v303 = vadd.f32 0.0, %v302
  %v304 = vpop.f32.mrb[0].mxu0
  %305 = vmatprep.mubr.f32.mxu0 %v42
  %306 = vmatmul.mubr.f32.gmra.mrb[0].mxu0 %v16
  %v307 = vpop.f32.mrb[0].mxu0
  %v308 = vadd.f32 0.0, %v307
  %v309 = vpop.f32.mrb[0].mxu0
  %310 = vdwg.mxu0
  %v311 = vmax.f32 %v214, %v303
  %v312 = vmax.f32 %v215, %v308
  %s313 = scalar_lea.vmem %s0, 456
  %v314 = vld [vmem:[%s313] sm:$0xff]
  %v315 = vld [vmem:[%s313 + $0x8] sm:$0xff]
  %v316 = vld [vmem:[%s313 + $0x10] sm:$0xff]
  %v317 = vld [vmem:[%s313 + $0x18] sm:$0xff]
  %v318 = vld [vmem:[%s313 + $0x20] sm:$0xff]
  %v319 = vld [vmem:[%s313 + $0x28] sm:$0xff]
  %v320 = vld [vmem:[%s313 + $0x30] sm:$0xff]
  %v321 = vld [vmem:[%s313 + $0x38] sm:$0xff]
  %v322 = vld [vmem:[%s313 + $0x40] sm:$0xff]
  %v323 = vld [vmem:[%s313 + $0x48] sm:$0xff]
  %v324 = vld [vmem:[%s313 + $0x50] sm:$0xff]
  %v325 = vld [vmem:[%s313 + $0x58] sm:$0xff]
  %v326 = vld [vmem:[%s313 + $0x60] sm:$0xff]
  %v327 = vld [vmem:[%s313 + $0x68] sm:$0xff]
  %v328 = vld [vmem:[%s313 + $0x70] sm:$0xff]
  %v329 = vld [vmem:[%s313 + $0x78] sm:$0xff]
  %v330 = vld [vmem:[%s313 + $0x80] sm:$0xff]
  %v331 = vld [vmem:[%s313 + $0x88] sm:$0xff]
  %v332 = vld [vmem:[%s313 + $0x90] sm:$0xff]
  %333 = vmatprep.subr.mxu0 0.0
  %334 = vmatpush1.msra.mxu0 %v314
  %335 = vmatprep.subr.mxu0 0.0
  %336 = vmatpush1.msra.mxu0 %v315
  %337 = vmatprep.subr.mxu0 0.0
  %338 = vmatpush1.msra.mxu0 %v316
  %339 = vmatprep.subr.mxu0 0.0
  %340 = vmatpush1.msra.mxu0 %v317
  %341 = vmatprep.subr.mxu0 0.0
  %342 = vmatpush1.msra.mxu0 %v318
  %343 = vmatprep.subr.mxu0 0.0
  %344 = vmatpush1.msra.mxu0 %v319
  %345 = vmatprep.subr.mxu0 0.0
  %346 = vmatpush1.msra.mxu0 %v320
  %347 = vmatprep.subr.mxu0 0.0
  %348 = vmatpush1.msra.mxu0 %v321
  %349 = vmatprep.subr.mxu0 0.0
  %350 = vmatpush1.msra.mxu0 %v322
  %351 = vmatprep.subr.mxu0 0.0
  %352 = vmatpush1.msra.mxu0 %v323
  %353 = vmatprep.subr.mxu0 0.0
  %354 = vmatpush1.msra.mxu0 %v324
  %355 = vmatprep.subr.mxu0 0.0
  %356 = vmatpush1.msra.mxu0 %v325
  %357 = vmatprep.subr.mxu0 0.0
  %358 = vmatpush1.msra.mxu0 %v326
  %359 = vmatprep.subr.mxu0 0.0
  %360 = vmatpush1.msra.mxu0 %v327
  %361 = vmatprep.subr.mxu0 0.0
  %362 = vmatpush1.msra.mxu0 %v328
  %363 = vmatprep.subr.mxu0 0.0
  %364 = vmatpush1.msra.mxu0 %v329
  %365 = vmatprep.subr.mxu0 0.0
  %366 = vmatpush1.msra.mxu0 %v330
  %367 = vmatprep.subr.mxu0 0.0
  %368 = vmatpush1.msra.mxu0 %v331
  %369 = vmatprep.subr.mxu0 0.0
  %370 = vmatpush1.msra.mxu0 %v332
  %371 = vmatprep.subr.mxu0 0.0
  %372 = vmatpush1.msra.mxu0 0.0
  %373 = vmatprep.subr.mxu0 0.0
  %374 = vmatpush1.msra.mxu0 0.0
  %375 = vmatprep.subr.mxu0 0.0
  %376 = vmatpush1.msra.mxu0 0.0
  %377 = vmatprep.subr.mxu0 0.0
  %378 = vmatpush1.msra.mxu0 0.0
  %379 = vmatprep.subr.mxu0 0.0
  %380 = vmatpush1.msra.mxu0 0.0
  %381 = vmatprep.subr.mxu0 0.0
  %382 = vmatpush1.msra.mxu0 0.0
  %383 = vmatprep.subr.mxu0 0.0
  %384 = vmatpush1.msra.mxu0 0.0
  %385 = vmatprep.subr.mxu0 0.0
  %386 = vmatpush1.msra.mxu0 0.0
  %387 = vmatprep.subr.mxu0 0.0
  %388 = vmatpush1.msra.mxu0 0.0
  %389 = vmatprep.subr.mxu0 0.0
  %390 = vmatpush1.msra.mxu0 0.0
  %391 = vmatprep.subr.mxu0 0.0
  %392 = vmatpush1.msra.mxu0 0.0
  %393 = vmatprep.subr.mxu0 0.0
  %394 = vmatpush1.msra.mxu0 0.0
  %395 = vmatprep.subr.mxu0 0.0
  %396 = vmatpush1.msra.mxu0 0.0
  %397 = vmatprep.mubr.f32.mxu0 %v39
  %398 = vmatmul.mubr.f32.gmra.mrb[0].mxu0 %v14
  %v399 = vpop.f32.mrb[0].mxu0
  %v400 = vadd.f32 0.0, %v399
  %v401 = vpop.f32.mrb[0].mxu0
  %402 = vmatprep.mubr.f32.mxu0 %v42
  %403 = vmatmul.mubr.f32.gmra.mrb[0].mxu0 %v16
  %v404 = vpop.f32.mrb[0].mxu0
  %v405 = vadd.f32 0.0, %v404
  %v406 = vpop.f32.mrb[0].mxu0
  %407 = vdwg.mxu0
  %v408 = vmax.f32 %v311, %v400
  %v409 = vmax.f32 %v312, %v405
  %v410 = vld [vmem:[%s2] sm:$0xff]
  %v411 = vld [vmem:[%s2 + $0x8] sm:$0xff]
  %413 = vset.pattern.permute.xlu0 0
  %414 = vperm.xlu0 %413, %v410
  %v415 = vpop.permute.xlu0 %414
  %418 = vset.pattern.permute.xlu0 0
  %419 = vperm.xlu0 %418, %v411
  %v420 = vpop.permute.xlu0 %419
  %v422 = vadd.f32 %v408, %v415
  %v423 = vadd.f32 %v409, %v420
  %v424 = vmax.f32 %v422, 0.0
  %v425 = vmax.f32 %v423, 0.0
  %vm426 = vcmask 408576
  %427 = vst.msk [vmem:[%s3] sm:$0xff] %vm426, %v424
  %428 = vst.msk [vmem:[%s3 + $0x8] sm:$0xff] %vm426, %v425
  // Predicated region
  $region14: #{net_forward.4} parent=0 // pred_check
    _
  $region15: #{net_forward.4} parent=0 // pred_check_branch
    %430 = sbr.rel (0) target = $region17
  $region16: #{net_forward.4} parent=0 // pred_region
    _
  $region17: #{net_forward.4} parent=0 // pred_fallthru
    _
  // Predicated region
  $region18: #{net_forward.4} parent=0 // pred_check
    _
  $region19: #{net_forward.4} parent=0 // pred_check_branch
    %432 = sbr.rel (0) target = $region21
  $region20: #{net_forward.4} parent=0 // pred_region
    _
  $region21: #{net_forward.4} parent=0 // pred_fallthru
    _

// kernel: net_forward.5
$region0: #{net_forward.5}
  #allocation0 [shape = 'u32[]', space=smem, size = 0x4, offset = 0x4, fixed_abs, tag = 'smem constant byte address 0x4 - core index']
  #allocation1 [shape = 'u32[144,128]{1,0:T(1,128)}', space=vmem, size = 0x12000, scoped, tag = 'internal scratch']
  %s0 = inlined_call_operand.vmem [shape: f32[2,400], index: 0, kind: input, shape index: {}]
  %s1 = inlined_call_operand.vmem [shape: f32[400,128], index: 1, kind: input, shape index: {}]
  %s2 = inlined_call_operand.vmem [shape: f32[1,128], index: 2, kind: input, shape index: {}]
  %s3 = inlined_call_operand.vmem [shape: f32[128,128], index: 3, kind: input, shape index: {}]
  %s4 = inlined_call_operand.vmem [shape: f32[1,128], index: 4, kind: input, shape index: {}]
  %s5 = inlined_call_operand.vmem [shape: f32[128,10], index: 5, kind: input, shape index: {}]
  %s6 = inlined_call_operand.vmem [shape: f32[1,10], index: 6, kind: input, shape index: {}]
  %s7 = inlined_call_operand.hbm [shape: f32[2,10], index: 7, kind: output, shape index: {}]
  %s8 = sld [smem:[#allocation0]]
  $region38: #{net_forward.5} parent=0
    _
  %s10 = ssub.s32 1, %s8
  %s11 = scalar_select 0, %s10, %s8
  $region1: #{net_forward.5} parent=0
    #allocation2 [shape = 'u8[1024]{0}', space=vmem, size = 0x400, scoped, tag = 'output window, operand 0, single buffered']
    #allocation3 [shape = 's32[1]{0}', space=sflag, size = 0x4, scoped, tag = 'scoped memory for net_forward.5']
    %12 = vsyncpa [#allocation3], 0
    // Predicated region
    $region2: #{net_forward.5} parent=1 // pred_check
      _
    $region3: #{net_forward.5} parent=1 // pred_check_branch
      %14 = sbr.rel (0) target = $region5
    $region4: #{net_forward.5} parent=1 // pred_region
      _
    $region5: #{net_forward.5} parent=1 // pred_fallthru
      _
    // Predicated region
    $region6: #{net_forward.5} parent=1 // pred_check
      _
    $region7: #{net_forward.5} parent=1 // pred_check_branch
      %16 = sbr.rel (0) target = $region9
    $region8: #{net_forward.5} parent=1 // pred_region
      _
    $region9: #{net_forward.5} parent=1 // pred_fallthru
      _
    // Predicated region
    $region10: #{net_forward.5} parent=1 // pred_check
      _
    $region11: #{net_forward.5} parent=1 // pred_check_branch
      %18 = sbr.rel (0) target = $region13
    $region12: #{net_forward.5} parent=1 // pred_region
      _
    $region13: #{net_forward.5} parent=1 // pred_fallthru
      _
    // Predicated region
    $region14: #{net_forward.5} parent=1 // pred_check
      _
    $region15: #{net_forward.5} parent=1 // pred_check_branch
      %20 = sbr.rel (0) target = $region17
    $region16: #{net_forward.5} parent=1 // pred_region
      _
    $region17: #{net_forward.5} parent=1 // pred_fallthru
      _
    // Predicated region
    $region18: #{net_forward.5} parent=1 // pred_check
      _
    $region19: #{net_forward.5} parent=1 // pred_check_branch
      %22 = sbr.rel (0) target = $region21
    $region20: #{net_forward.5} parent=1 // pred_region
      _
    $region21: #{net_forward.5} parent=1 // pred_fallthru
      _
    // Predicated region
    $region22: #{net_forward.5} parent=1 // pred_check
      _
    $region23: #{net_forward.5} parent=1 // pred_check_branch
      %24 = sbr.rel (0) target = $region25
    $region24: #{net_forward.5} parent=1 // pred_region
      _
    $region25: #{net_forward.5} parent=1 // pred_fallthru
      _
    // Predicated region
    $region26: #{net_forward.5} parent=1 // pred_check
      _
    $region27: #{net_forward.5} parent=1 // pred_check_branch
      %26 = sbr.rel (0) target = $region29
    $region28: #{net_forward.5} parent=1 // pred_region
      _
    $region29: #{net_forward.5} parent=1 // pred_fallthru
      _
    %v27 = vld [vmem:[%s0] sm:$0xff]
    %v28 = vld [vmem:[%s1] sm:$0xff]
    %v29 = vld [vmem:[%s1 + $0x8] sm:$0xff]
    %v30 = vld [vmem:[%s1 + $0x10] sm:$0xff]
    %v31 = vld [vmem:[%s1 + $0x18] sm:$0xff]
    %v32 = vld [vmem:[%s1 + $0x20] sm:$0xff]
    %v33 = vld [vmem:[%s1 + $0x28] sm:$0xff]
    %v34 = vld [vmem:[%s1 + $0x30] sm:$0xff]
    %v35 = vld [vmem:[%s1 + $0x38] sm:$0xff]
    %v36 = vld [vmem:[%s1 + $0x40] sm:$0xff]
    %v37 = vld [vmem:[%s1 + $0x48] sm:$0xff]
    %v38 = vld [vmem:[%s1 + $0x50] sm:$0xff]
    %v39 = vld [vmem:[%s1 + $0x58] sm:$0xff]
    %v40 = vld [vmem:[%s1 + $0x60] sm:$0xff]
    %v41 = vld [vmem:[%s1 + $0x68] sm:$0xff]
    %v42 = vld [vmem:[%s1 + $0x70] sm:$0xff]
    %v43 = vld [vmem:[%s1 + $0x78] sm:$0xff]
    %v44 = vld [vmem:[%s1 + $0x80] sm:$0xff]
    %v45 = vld [vmem:[%s1 + $0x88] sm:$0xff]
    %v46 = vld [vmem:[%s1 + $0x90] sm:$0xff]
    %v47 = vld [vmem:[%s1 + $0x98] sm:$0xff]
    %v48 = vld [vmem:[%s1 + $0xa0] sm:$0xff]
    %v49 = vld [vmem:[%s1 + $0xa8] sm:$0xff]
    %v50 = vld [vmem:[%s1 + $0xb0] sm:$0xff]
    %v51 = vld [vmem:[%s1 + $0xb8] sm:$0xff]
    %v52 = vld [vmem:[%s1 + $0xc0] sm:$0xff]
    %v53 = vld [vmem:[%s1 + $0xc8] sm:$0xff]
    %v54 = vld [vmem:[%s1 + $0xd0] sm:$0xff]
    %v55 = vld [vmem:[%s1 + $0xd8] sm:$0xff]
    %v56 = vld [vmem:[%s1 + $0xe0] sm:$0xff]
    %v57 = vld [vmem:[%s1 + $0xe8] sm:$0xff]
    %v58 = vld [vmem:[%s1 + $0xf0] sm:$0xff]
    %v59 = vld [vmem:[%s1 + $0xf8] sm:$0xff]
    %v60 = vld [vmem:[%s1 + $0x100] sm:$0xff]
    %v61 = vld [vmem:[%s1 + $0x108] sm:$0xff]
    %v62 = vld [vmem:[%s1 + $0x110] sm:$0xff]
    %v63 = vld [vmem:[%s1 + $0x118] sm:$0xff]
    %v64 = vld [vmem:[%s1 + $0x120] sm:$0xff]
    %v65 = vld [vmem:[%s1 + $0x128] sm:$0xff]
    %v66 = vld [vmem:[%s1 + $0x130] sm:$0xff]
    %v67 = vld [vmem:[%s1 + $0x138] sm:$0xff]
    %v68 = vld [vmem:[%s1 + $0x140] sm:$0xff]
    %v69 = vld [vmem:[%s1 + $0x148] sm:$0xff]
    %v70 = vld [vmem:[%s1 + $0x150] sm:$0xff]
    %v71 = vld [vmem:[%s1 + $0x158] sm:$0xff]
    %v72 = vld [vmem:[%s1 + $0x160] sm:$0xff]
    %v73 = vld [vmem:[%s1 + $0x168] sm:$0xff]
    %v74 = vld [vmem:[%s1 + $0x170] sm:$0xff]
    %v75 = vld [vmem:[%s1 + $0x178] sm:$0xff]
    %v76 = vld [vmem:[%s1 + $0x180] sm:$0xff]
    %v77 = vld [vmem:[%s1 + $0x188] sm:$0xff]
    %v78 = vld [vmem:[%s2] sm:$0x1]
    %v80 = vlaneseq
    %v81 = vshrl.u32 %v80, 7
    %v82 = vsub.s32 0, %v81
    %v83 = vrot.slane %v78, %v82
    %v86 = vcombine.high %v27, %v27
    %v88 = vunpack.c.l.s4 1983009808
    %v89 = vunpack.c.0.s8 %v88
    %v90 = vlaneseq
    %v91 = vshrl.u32 %v90, 7
    %v92 = vsub.s32 %v89, %v91
    %v93 = vrot.slane %v27, %v92
    %v95 = vunpack.c.l.s4 1983009808
    %v96 = vunpack.c.0.s8 %v95
    %v97 = vlaneseq
    %v98 = vshrl.u32 %v97, 7
    %v99 = vsub.s32 %v96, %v98
    %v100 = vrot.slane %v86, %v99
    %v101 = vcombine.high %v93, %v93
    %v102 = vcombine.high %v100, %v100
    %vm106 = vcmask 130048
    %v107 = vsel %vm106, %v102, 0
    %109 = vmatprep.subr.mxu0 0.0
    %110 = vmatpush1.msra.mxu0 %v28
    %111 = vmatprep.subr.mxu0 0.0
    %112 = vmatpush1.msra.mxu0 %v29
    %113 = vmatprep.subr.mxu0 0.0
    %114 = vmatpush1.msra.mxu0 %v30
    %115 = vmatprep.subr.mxu0 0.0
    %116 = vmatpush1.msra.mxu0 %v31
    %117 = vmatprep.subr.mxu0 0.0
    %118 = vmatpush1.msra.mxu0 %v32
    %119 = vmatprep.subr.mxu0 0.0
    %120 = vmatpush1.msra.mxu0 %v33
    %121 = vmatprep.subr.mxu0 0.0
    %122 = vmatpush1.msra.mxu0 %v34
    %123 = vmatprep.subr.mxu0 0.0
    %124 = vmatpush1.msra.mxu0 %v35
    %125 = vmatprep.subr.mxu0 0.0
    %126 = vmatpush1.msra.mxu0 %v36
    %127 = vmatprep.subr.mxu0 0.0
    %128 = vmatpush1.msra.mxu0 %v37
    %129 = vmatprep.subr.mxu0 0.0
    %130 = vmatpush1.msra.mxu0 %v38
    %131 = vmatprep.subr.mxu0 0.0
    %132 = vmatpush1.msra.mxu0 %v39
    %133 = vmatprep.subr.mxu0 0.0
    %134 = vmatpush1.msra.mxu0 %v40
    %135 = vmatprep.subr.mxu0 0.0
    %136 = vmatpush1.msra.mxu0 %v41
    %137 = vmatprep.subr.mxu0 0.0
    %138 = vmatpush1.msra.mxu0 %v42
    %139 = vmatprep.subr.mxu0 0.0
    %140 = vmatpush1.msra.mxu0 %v43
    %141 = vmatprep.subr.mxu0 0.0
    %142 = vmatpush1.msra.mxu0 %v44
    %143 = vmatprep.subr.mxu0 0.0
    %144 = vmatpush1.msra.mxu0 %v45
    %145 = vmatprep.subr.mxu0 0.0
    %146 = vmatpush1.msra.mxu0 %v46
    %147 = vmatprep.subr.mxu0 0.0
    %148 = vmatpush1.msra.mxu0 %v47
    %149 = vmatprep.subr.mxu0 0.0
    %150 = vmatpush1.msra.mxu0 %v48
    %151 = vmatprep.subr.mxu0 0.0
    %152 = vmatpush1.msra.mxu0 %v49
    %153 = vmatprep.subr.mxu0 0.0
    %154 = vmatpush1.msra.mxu0 %v50
    %155 = vmatprep.subr.mxu0 0.0
    %156 = vmatpush1.msra.mxu0 %v51
    %157 = vmatprep.subr.mxu0 0.0
    %158 = vmatpush1.msra.mxu0 %v52
    %159 = vmatprep.subr.mxu0 0.0
    %160 = vmatpush1.msra.mxu0 %v53
    %161 = vmatprep.subr.mxu0 0.0
    %162 = vmatpush1.msra.mxu0 %v54
    %163 = vmatprep.subr.mxu0 0.0
    %164 = vmatpush1.msra.mxu0 %v55
    %165 = vmatprep.subr.mxu0 0.0
    %166 = vmatpush1.msra.mxu0 %v56
    %167 = vmatprep.subr.mxu0 0.0
    %168 = vmatpush1.msra.mxu0 %v57
    %169 = vmatprep.subr.mxu0 0.0
    %170 = vmatpush1.msra.mxu0 %v58
    %171 = vmatprep.subr.mxu0 0.0
    %172 = vmatpush1.msra.mxu0 %v59
    %173 = vmatprep.mubr.f32.mxu0 %v101
    %174 = vmatmul.mubr.f32.gmra.mrb[0].mxu0 %v93
    %v175 = vpop.f32.mrb[0].mxu0
    %v176 = vadd.f32 %v83, %v175
    %v177 = vpop.f32.mrb[0].mxu0
    %178 = vdwg.mxu0
    %179 = vmatprep.subr.mxu0 0.0
    %180 = vmatpush1.msra.mxu0 %v60
    %181 = vmatprep.subr.mxu0 0.0
    %182 = vmatpush1.msra.mxu0 %v61
    %183 = vmatprep.subr.mxu0 0.0
    %184 = vmatpush1.msra.mxu0 %v62
    %185 = vmatprep.subr.mxu0 0.0
    %186 = vmatpush1.msra.mxu0 %v63
    %187 = vmatprep.subr.mxu0 0.0
    %188 = vmatpush1.msra.mxu0 %v64
    %189 = vmatprep.subr.mxu0 0.0
    %190 = vmatpush1.msra.mxu0 %v65
    %191 = vmatprep.subr.mxu0 0.0
    %192 = vmatpush1.msra.mxu0 %v66
    %193 = vmatprep.subr.mxu0 0.0
    %194 = vmatpush1.msra.mxu0 %v67
    %195 = vmatprep.subr.mxu0 0.0
    %196 = vmatpush1.msra.mxu0 %v68
    %197 = vmatprep.subr.mxu0 0.0
    %198 = vmatpush1.msra.mxu0 %v69
    %199 = vmatprep.subr.mxu0 0.0
    %200 = vmatpush1.msra.mxu0 %v70
    %201 = vmatprep.subr.mxu0 0.0
    %202 = vmatpush1.msra.mxu0 %v71
    %203 = vmatprep.subr.mxu0 0.0
    %204 = vmatpush1.msra.mxu0 %v72
    %205 = vmatprep.subr.mxu0 0.0
    %206 = vmatpush1.msra.mxu0 %v73
    %207 = vmatprep.subr.mxu0 0.0
    %208 = vmatpush1.msra.mxu0 %v74
    %209 = vmatprep.subr.mxu0 0.0
    %210 = vmatpush1.msra.mxu0 %v75
    %211 = vmatprep.subr.mxu0 0.0
    %212 = vmatpush1.msra.mxu0 %v76
    %213 = vmatprep.subr.mxu0 0.0
    %214 = vmatpush1.msra.mxu0 %v77
    %215 = vmatprep.subr.mxu0 0.0
    %216 = vmatpush1.msra.mxu0 0.0
    %217 = vmatprep.subr.mxu0 0.0
    %218 = vmatpush1.msra.mxu0 0.0
    %219 = vmatprep.subr.mxu0 0.0
    %220 = vmatpush1.msra.mxu0 0.0
    %221 = vmatprep.subr.mxu0 0.0
    %222 = vmatpush1.msra.mxu0 0.0
    %223 = vmatprep.subr.mxu0 0.0
    %224 = vmatpush1.msra.mxu0 0.0
    %225 = vmatprep.subr.mxu0 0.0
    %226 = vmatpush1.msra.mxu0 0.0
    %227 = vmatprep.subr.mxu0 0.0
    %228 = vmatpush1.msra.mxu0 0.0
    %229 = vmatprep.subr.mxu0 0.0
    %230 = vmatpush1.msra.mxu0 0.0
    %231 = vmatprep.subr.mxu0 0.0
    %232 = vmatpush1.msra.mxu0 0.0
    %233 = vmatprep.subr.mxu0 0.0
    %234 = vmatpush1.msra.mxu0 0.0
    %235 = vmatprep.subr.mxu0 0.0
    %236 = vmatpush1.msra.mxu0 0.0
    %237 = vmatprep.subr.mxu0 0.0
    %238 = vmatpush1.msra.mxu0 0.0
    %239 = vmatprep.subr.mxu0 0.0
    %240 = vmatpush1.msra.mxu0 0.0
    %241 = vmatprep.subr.mxu0 0.0
    %242 = vmatpush1.msra.mxu0 0.0
    %243 = vmatprep.mubr.f32.mxu0 %v107
    %244 = vmatmul.mubr.f32.gmra.mrb[0].mxu0 %v100
    %v245 = vpop.f32.mrb[0].mxu0
    %v246 = vadd.f32 %v176, %v245
    %v247 = vpop.f32.mrb[0].mxu0
    %248 = vdwg.mxu0
    %v249 = vmax.f32 %v246, 0.0
    %v250 = vld [vmem:[%s3] sm:$0xff]
    %v251 = vld [vmem:[%s3 + $0x8] sm:$0xff]
    %v252 = vld [vmem:[%s3 + $0x10] sm:$0xff]
    %v253 = vld [vmem:[%s3 + $0x18] sm:$0xff]
    %v254 = vld [vmem:[%s3 + $0x20] sm:$0xff]
    %v255 = vld [vmem:[%s3 + $0x28] sm:$0xff]
    %v256 = vld [vmem:[%s3 + $0x30] sm:$0xff]
    %v257 = vld [vmem:[%s3 + $0x38] sm:$0xff]
    %v258 = vld [vmem:[%s3 + $0x40] sm:$0xff]
    %v259 = vld [vmem:[%s3 + $0x48] sm:$0xff]
    %v260 = vld [vmem:[%s3 + $0x50] sm:$0xff]
    %v261 = vld [vmem:[%s3 + $0x58] sm:$0xff]
    %v262 = vld [vmem:[%s3 + $0x60] sm:$0xff]
    %v263 = vld [vmem:[%s3 + $0x68] sm:$0xff]
    %v264 = vld [vmem:[%s3 + $0x70] sm:$0xff]
    %v265 = vld [vmem:[%s3 + $0x78] sm:$0xff]
    %v266 = vld [vmem:[%s4] sm:$0x1]
    %v268 = vlaneseq
    %v269 = vshrl.u32 %v268, 7
    %v270 = vsub.s32 0, %v269
    %v271 = vrot.slane %v266, %v270
    %273 = vmatprep.subr.mxu0 0.0
    %274 = vmatpush1.msra.mxu0 %v250
    %275 = vmatprep.subr.mxu0 0.0
    %276 = vmatpush1.msra.mxu0 %v251
    %277 = vmatprep.subr.mxu0 0.0
    %278 = vmatpush1.msra.mxu0 %v252
    %279 = vmatprep.subr.mxu0 0.0
    %280 = vmatpush1.msra.mxu0 %v253
    %281 = vmatprep.subr.mxu0 0.0
    %282 = vmatpush1.msra.mxu0 %v254
    %283 = vmatprep.subr.mxu0 0.0
    %284 = vmatpush1.msra.mxu0 %v255
    %285 = vmatprep.subr.mxu0 0.0
    %286 = vmatpush1.msra.mxu0 %v256
    %287 = vmatprep.subr.mxu0 0.0
    %288 = vmatpush1.msra.mxu0 %v257
    %289 = vmatprep.subr.mxu0 0.0
    %290 = vmatpush1.msra.mxu0 %v258
    %291 = vmatprep.subr.mxu0 0.0
    %292 = vmatpush1.msra.mxu0 %v259
    %293 = vmatprep.subr.mxu0 0.0
    %294 = vmatpush1.msra.mxu0 %v260
    %295 = vmatprep.subr.mxu0 0.0
    %296 = vmatpush1.msra.mxu0 %v261
    %297 = vmatprep.subr.mxu0 0.0
    %298 = vmatpush1.msra.mxu0 %v262
    %299 = vmatprep.subr.mxu0 0.0
    %300 = vmatpush1.msra.mxu0 %v263
    %301 = vmatprep.subr.mxu0 0.0
    %302 = vmatpush1.msra.mxu0 %v264
    %303 = vmatprep.subr.mxu0 0.0
    %304 = vmatpush1.msra.mxu0 %v265
    %305 = vmatprep.subr.mxu0 0.0
    %306 = vmatpush1.msra.mxu0 0.0
    %307 = vmatprep.subr.mxu0 0.0
    %308 = vmatpush1.msra.mxu0 0.0
    %309 = vmatprep.subr.mxu0 0.0
    %310 = vmatpush1.msra.mxu0 0.0
    %311 = vmatprep.subr.mxu0 0.0
    %312 = vmatpush1.msra.mxu0 0.0
    %313 = vmatprep.subr.mxu0 0.0
    %314 = vmatpush1.msra.mxu0 0.0
    %315 = vmatprep.subr.mxu0 0.0
    %316 = vmatpush1.msra.mxu0 0.0
    %317 = vmatprep.subr.mxu0 0.0
    %318 = vmatpush1.msra.mxu0 0.0
    %319 = vmatprep.subr.mxu0 0.0
    %320 = vmatpush1.msra.mxu0 0.0
    %321 = vmatprep.subr.mxu0 0.0
    %322 = vmatpush1.msra.mxu0 0.0
    %323 = vmatprep.subr.mxu0 0.0
    %324 = vmatpush1.msra.mxu0 0.0
    %325 = vmatprep.subr.mxu0 0.0
    %326 = vmatpush1.msra.mxu0 0.0
    %327 = vmatprep.subr.mxu0 0.0
    %328 = vmatpush1.msra.mxu0 0.0
    %329 = vmatprep.subr.mxu0 0.0
    %330 = vmatpush1.msra.mxu0 0.0
    %331 = vmatprep.subr.mxu0 0.0
    %332 = vmatpush1.msra.mxu0 0.0
    %333 = vmatprep.subr.mxu0 0.0
    %334 = vmatpush1.msra.mxu0 0.0
    %335 = vmatprep.subr.mxu0 0.0
    %336 = vmatpush1.msra.mxu0 0.0
    %337 = vmatprep.mubr.f32.mxu0 0.0
    %338 = vmatmul.mubr.f32.gmra.mrb[0].mxu0 %v249
    %v339 = vpop.f32.mrb[0].mxu0
    %v340 = vadd.f32 %v271, %v339
    %v341 = vpop.f32.mrb[0].mxu0
    %342 = vdwg.mxu0
    %v343 = vmax.f32 %v340, 0.0
    %v344 = vld [vmem:[%s5] sm:$0xff]
    %v345 = vld [vmem:[%s5 + $0x8] sm:$0xff]
    %v346 = vld [vmem:[%s5 + $0x10] sm:$0xff]
    %v347 = vld [vmem:[%s5 + $0x18] sm:$0xff]
    %v348 = vld [vmem:[%s5 + $0x20] sm:$0xff]
    %v349 = vld [vmem:[%s5 + $0x28] sm:$0xff]
    %v350 = vld [vmem:[%s5 + $0x30] sm:$0xff]
    %v351 = vld [vmem:[%s5 + $0x38] sm:$0xff]
    %v352 = vld [vmem:[%s5 + $0x40] sm:$0xff]
    %v353 = vld [vmem:[%s5 + $0x48] sm:$0xff]
    %v354 = vld [vmem:[%s5 + $0x50] sm:$0xff]
    %v355 = vld [vmem:[%s5 + $0x58] sm:$0xff]
    %v356 = vld [vmem:[%s5 + $0x60] sm:$0xff]
    %v357 = vld [vmem:[%s5 + $0x68] sm:$0xff]
    %v358 = vld [vmem:[%s5 + $0x70] sm:$0xff]
    %v359 = vld [vmem:[%s5 + $0x78] sm:$0xff]
    %v360 = vld [vmem:[%s6] sm:$0x1]
    %v362 = vlaneseq
    %v363 = vshrl.u32 %v362, 7
    %v364 = vsub.s32 0, %v363
    %v365 = vrot.slane %v360, %v364
    %367 = vmatprep.subr.mxu0 0.0
    %368 = vmatpush1.msra.mxu0 %v344
    %369 = vmatprep.subr.mxu0 0.0
    %370 = vmatpush1.msra.mxu0 %v345
    %371 = vmatprep.subr.mxu0 0.0
    %372 = vmatpush1.msra.mxu0 %v346
    %373 = vmatprep.subr.mxu0 0.0
    %374 = vmatpush1.msra.mxu0 %v347
    %375 = vmatprep.subr.mxu0 0.0
    %376 = vmatpush1.msra.mxu0 %v348
    %377 = vmatprep.subr.mxu0 0.0
    %378 = vmatpush1.msra.mxu0 %v349
    %379 = vmatprep.subr.mxu0 0.0
    %380 = vmatpush1.msra.mxu0 %v350
    %381 = vmatprep.subr.mxu0 0.0
    %382 = vmatpush1.msra.mxu0 %v351
    %383 = vmatprep.subr.mxu0 0.0
    %384 = vmatpush1.msra.mxu0 %v352
    %385 = vmatprep.subr.mxu0 0.0
    %386 = vmatpush1.msra.mxu0 %v353
    %387 = vmatprep.subr.mxu0 0.0
    %388 = vmatpush1.msra.mxu0 %v354
    %389 = vmatprep.subr.mxu0 0.0
    %390 = vmatpush1.msra.mxu0 %v355
    %391 = vmatprep.subr.mxu0 0.0
    %392 = vmatpush1.msra.mxu0 %v356
    %393 = vmatprep.subr.mxu0 0.0
    %394 = vmatpush1.msra.mxu0 %v357
    %395 = vmatprep.subr.mxu0 0.0
    %396 = vmatpush1.msra.mxu0 %v358
    %397 = vmatprep.subr.mxu0 0.0
    %398 = vmatpush1.msra.mxu0 %v359
    %399 = vmatprep.subr.mxu0 0.0
    %400 = vmatpush1.msra.mxu0 0.0
    %401 = vmatprep.subr.mxu0 0.0
    %402 = vmatpush1.msra.mxu0 0.0
    %403 = vmatprep.subr.mxu0 0.0
    %404 = vmatpush1.msra.mxu0 0.0
    %405 = vmatprep.subr.mxu0 0.0
    %406 = vmatpush1.msra.mxu0 0.0
    %407 = vmatprep.subr.mxu0 0.0
    %408 = vmatpush1.msra.mxu0 0.0
    %409 = vmatprep.subr.mxu0 0.0
    %410 = vmatpush1.msra.mxu0 0.0
    %411 = vmatprep.subr.mxu0 0.0
    %412 = vmatpush1.msra.mxu0 0.0
    %413 = vmatprep.subr.mxu0 0.0
    %414 = vmatpush1.msra.mxu0 0.0
    %415 = vmatprep.subr.mxu0 0.0
    %416 = vmatpush1.msra.mxu0 0.0
    %417 = vmatprep.subr.mxu0 0.0
    %418 = vmatpush1.msra.mxu0 0.0
    %419 = vmatprep.subr.mxu0 0.0
    %420 = vmatpush1.msra.mxu0 0.0
    %421 = vmatprep.subr.mxu0 0.0
    %422 = vmatpush1.msra.mxu0 0.0
    %423 = vmatprep.subr.mxu0 0.0
    %424 = vmatpush1.msra.mxu0 0.0
    %425 = vmatprep.subr.mxu0 0.0
    %426 = vmatpush1.msra.mxu0 0.0
    %427 = vmatprep.subr.mxu0 0.0
    %428 = vmatpush1.msra.mxu0 0.0
    %429 = vmatprep.subr.mxu0 0.0
    %430 = vmatpush1.msra.mxu0 0.0
    %431 = vmatprep.mubr.f32.mxu0 0.0
    %432 = vmatmul.mubr.f32.gmra.mrb[0].mxu0 %v343
    %v433 = vpop.f32.mrb[0].mxu0
    %v434 = vadd.f32 %v365, %v433
    %v435 = vpop.f32.mrb[0].mxu0
    %436 = vdwg.mxu0
    %vm437 = vcmask 74752
    %438 = vst.msk [vmem:[#allocation2] sm:$0x3] %vm437, %v434
    // Predicated region
    $region30: #{net_forward.5} parent=1 // pred_check
      _
    $region31: #{net_forward.5} parent=1 // pred_check_branch
      %440 = sbr.rel (0) target = $region33
    $region32: #{net_forward.5} parent=1 // pred_region
      %s442 = ssub.s32 32, 32
      %443 = vsyncadd [#allocation3], %s442
      %s445 = sshll.u32 [#allocation2], 4
      %s446 = int_to_ptr.vmem [resolvable:$true] %s445
      %448 = dma.vmem_to_hbm [thread:$0]  %s446, 32, %s7, [#allocation3]
    $region33: #{net_forward.5} parent=1 // pred_fallthru
      _
    // Predicated region
    $region34: #{net_forward.5} parent=1 // pred_check
      _
    $region35: #{net_forward.5} parent=1 // pred_check_branch
      %450 = sbr.rel (0) target = $region37
    $region36: #{net_forward.5} parent=1 // pred_region
      %451 = dma.done [#allocation3], 32
    $region37: #{net_forward.5} parent=1 // pred_fallthru
      _
    %452 = vsyncpa [#allocation3], 1

</llo_original>
